<compile_context>
chip_gen: v7x
topology: tpu7x:2x2x1
jax: 0.10.0
libtpu: 0.0.40
codegen_flags: <defaults>
</compile_context>

<pallas_src>
import numpy as np
import jax
import jax.numpy as jnp
from jax.experimental import pallas as pl
from jax.experimental.pallas import tpu as pltpu

n_input = 5
n_hidden = 8
n_output = 1
n_layers = 1  # single-layer LSTM (network == 'LSTM')


def _tree_sum(terms):
    """Pairwise (tree) summation: dependency depth log2(n) instead of n."""
    while len(terms) > 1:
        nxt = [terms[i] + terms[i + 1] for i in range(0, len(terms) - 1, 2)]
        if len(terms) % 2:
            nxt.append(terms[-1])
        terms = nxt
    return terms[0]


def lstm_fc_exp_kernel(x_ref, wih_ref, whh_ref, b_ref, wfc_ref, bfc_ref,
                       h0_ref, c0_ref, out_ref, hn_ref, cn_ref,
                       gx_sc, h_all_sc):
    """Whole sequence in one kernel invocation.

    x_ref  : (T*B, I)    flattened input sequence
    wih_ref: (I, 4H)     W_ih^T, gate order [i, f, o, g], i/f/o columns * 0.5
    whh_ref: (H, 4H)     W_hh^T, gate order [i, f, o, g], i/f/o columns * 0.5
    b_ref  : (1, 4H)     b_ih + b_hh (permuted, i/f/o * 0.5)
    wfc_ref: (1, H)      fc weight row (n_output == 1)
    bfc_ref: (1, 1)      fc bias
    h0/c0  : (B, H)
    outputs: out (T, B, 1), hn (B, H), cn (B, H)
    scratch: gx_sc (T*B, 4H), h_all_sc (T, B, H)
    """
    B, H = hn_ref.shape
    TB, G = gx_sc.shape
    T = TB // B
    I = x_ref.shape[1]

    # -------- Prologue (off the serial recurrence path) --------
    # Input projection x @ W_ih^T + b as I=5 broadcast FMAs on the VPU:
    # no MXU launch, no precision ambiguity; one VMEM scratch write.
    x = x_ref[...]                       # (T*B, I)
    wih = wih_ref[...]                   # (I, 4H)
    gx = jnp.broadcast_to(b_ref[...], (TB, G))
    gx = gx + _tree_sum([x[:, i:i + 1] * wih[i:i + 1, :] for i in range(I)])
    gx_sc[...] = gx

    # Hoist loop-invariant W_hh rows, pre-broadcast to the (B, 4H) gate slab
    # (JAX does not CSE broadcast_in_dim -> do it once, outside the time loop).
    whh = whh_ref[...]                   # (H, 4H)
    whh_rows = [jnp.broadcast_to(whh[k:k + 1, :], (B, G)) for k in range(H)]

    h = h0_ref[...]                      # (B, H) carried in vregs
    c = c0_ref[...]

    # -------- Recurrence: T small & static -> fully unrolled Python loop --------
    # Per-step h @ W_hh^T done as H=8 broadcast multiply-adds (tree-summed) on
    # the VPU: the MXU push/drain/pop round-trip is removed from the serial chain.
    # TODO(synk): if T grows beyond ~16-32, switch to lax.fori_loop(unroll=k)
    # with (h, c) as carries to bound vreg live ranges / code size.
    for t in range(T):
        gx_t = gx_sc[pl.ds(t * B, B), :]                        # (B, 4H)
        rec = _tree_sum([h[:, k:k + 1] * whh_rows[k] for k in range(H)])
        gates = gx_t + rec                                      # i/f/o pre-scaled by 0.5
        # Single EUP slab for all four gates: sigmoid(z) = 0.5*tanh(z/2) + 0.5,
        # the /2 is baked into the i/f/o weight columns at param-prep time.
        tg = jnp.tanh(gates)
        sg = 0.5 * tg[:, :3 * H] + 0.5                          # sigmoid of [i | f | o]
        i_g = sg[:, 0:H]
        f_g = sg[:, H:2 * H]
        o_g = sg[:, 2 * H:3 * H]
        g_g = tg[:, 3 * H:]                                     # tanh(g)
        c = f_g * c + i_g * g_g
        h = o_g * jnp.tanh(c)
        h_all_sc[t] = h

    hn_ref[...] = h
    cn_ref[...] = c

    # -------- Hoisted FC + exp (n_output == 1 -> lane reduction over H) --------
    h_all = h_all_sc[...]                                       # (T, B, H)
    y = jnp.sum(h_all * wfc_ref[...], axis=-1, keepdims=True) + bfc_ref[...]
    out_ref[...] = jnp.exp(y)


def prepare_params(params):
    """One-time parameter preprocessing (hoisted out of the per-call path).

    - PyTorch gate order [i, f, g, o] -> [i, f, o, g] so one nonlinearity slab
      covers [i|f|o] and one covers g.
    - Transposes W_ih / W_hh, folds b_ih + b_hh.
    - Bakes the 0.5 pre-scale of the sigmoid-via-tanh trick into the i/f/o
      columns of W_ih^T, W_hh^T and the bias (zero per-step cost in the kernel).
    """
    w_ih, w_hh, b_ih, b_hh, w_fc, b_fc = params
    H = n_hidden
    perm = np.concatenate([np.arange(0, 2 * H), np.arange(3 * H, 4 * H),
                           np.arange(2 * H, 3 * H)])
    scale = np.concatenate([np.full(3 * H, 0.5, np.float32),
                            np.ones(H, np.float32)])[None, :]
    wih_t = jnp.transpose(w_ih).astype(jnp.float32)[:, perm] * scale   # (I, 4H)
    whh_t = jnp.transpose(w_hh).astype(jnp.float32)[:, perm] * scale   # (H, 4H)
    b = (b_ih + b_hh).astype(jnp.float32)[perm].reshape(1, 4 * H) * scale
    wfc_row = w_fc.reshape(1, H).astype(jnp.float32)
    bfc = b_fc.reshape(1, n_output).astype(jnp.float32)
    return (wih_t, whh_t, b, wfc_row, bfc)


def rnn_forward(x, prepped, hx=None):
    """x: (T, B, n_input) float32. Returns (out, (h_n, c_n)) like the torch module."""
    T, B, I = x.shape
    H = n_hidden
    wih_t, whh_t, b, wfc_row, bfc = prepped

    if hx is None:
        h0 = jnp.zeros((B, H), jnp.float32)
        c0 = jnp.zeros((B, H), jnp.float32)
    else:
        h0 = hx[0].reshape(B, H).astype(jnp.float32)
        c0 = hx[1].reshape(B, H).astype(jnp.float32)

    x_flat = x.reshape(T * B, I).astype(jnp.float32)

    # Single grid step: everything (a few KB) is VMEM resident.  No tiling or
    # batch grid axis is warranted at this size on v5e/v6e/v7x; only consider a
    # core_parallel batch axis if B grows into the hundreds.
    out, h_n, c_n = pl.pallas_call(
        lstm_fc_exp_kernel,
        out_shape=(
            jax.ShapeDtypeStruct((T, B, n_output), jnp.float32),
            jax.ShapeDtypeStruct((B, H), jnp.float32),
            jax.ShapeDtypeStruct((B, H), jnp.float32),
        ),
        grid_spec=pltpu.PrefetchScalarGridSpec(
            num_scalar_prefetch=0,
            grid=(1,),  # whole sequence handled in one invocation
            in_specs=[
                pl.BlockSpec((T * B, I), lambda i: (0, 0)),        # x (flattened)
                pl.BlockSpec((I, 4 * H), lambda i: (0, 0)),        # W_ih^T (perm + 0.5)
                pl.BlockSpec((H, 4 * H), lambda i: (0, 0)),        # W_hh^T (perm + 0.5)
                pl.BlockSpec((1, 4 * H), lambda i: (0, 0)),        # bias
                pl.BlockSpec((1, H), lambda i: (0, 0)),            # fc weight row
                pl.BlockSpec((1, n_output), lambda i: (0, 0)),     # fc bias
                pl.BlockSpec((B, H), lambda i: (0, 0)),            # h0
                pl.BlockSpec((B, H), lambda i: (0, 0)),            # c0
            ],
            out_specs=[
                pl.BlockSpec((T, B, n_output), lambda i: (0, 0, 0)),  # out
                pl.BlockSpec((B, H), lambda i: (0, 0)),               # h_n
                pl.BlockSpec((B, H), lambda i: (0, 0)),               # c_n
            ],
            scratch_shapes=[
                pltpu.VMEM((T * B, 4 * H), jnp.float32),   # gx (in-kernel input projection)
                pltpu.VMEM((T, B, H), jnp.float32),        # per-step hidden states
            ],
        ),
        compiler_params=pltpu.CompilerParams(
            dimension_semantics=("arbitrary",)),
    )(x_flat, wih_t, whh_t, b, wfc_row, bfc, h0, c0)

    return out, (h_n.reshape(n_layers, B, H), c_n.reshape(n_layers, B, H))


def rnn_forward_ref(x, params, hx=None):
    """Pure-JAX reference (lax.scan) for verification (full f32 precision)."""
    T, B, I = x.shape
    H = n_hidden
    hi = jax.lax.Precision.HIGHEST
    w_ih, w_hh, b_ih, b_hh, w_fc, b_fc = params
    if hx is None:
        h0 = jnp.zeros((B, H), jnp.float32)
        c0 = jnp.zeros((B, H), jnp.float32)
    else:
        h0, c0 = hx[0].reshape(B, H), hx[1].reshape(B, H)

    def step(carry, x_t):
        h, c = carry
        gates = (jnp.dot(x_t, w_ih.T, precision=hi)
                 + jnp.dot(h, w_hh.T, precision=hi) + b_ih + b_hh)
        i_g = jax.nn.sigmoid(gates[:, 0:H])
        f_g = jax.nn.sigmoid(gates[:, H:2 * H])
        g_g = jnp.tanh(gates[:, 2 * H:3 * H])
        o_g = jax.nn.sigmoid(gates[:, 3 * H:4 * H])
        c = f_g * c + i_g * g_g
        h = o_g * jnp.tanh(c)
        return (h, c), h

    (h_n, c_n), hs = jax.lax.scan(step, (h0, c0), x)
    out = jnp.exp(jnp.dot(hs, w_fc.T, precision=hi) + b_fc)
    return out, (h_n[None], c_n[None])


def init_params(key):
    """Deterministic init mimicking PyTorch's uniform(-1/sqrt(H), 1/sqrt(H))."""
    H, I = n_hidden, n_input
    k = 1.0 / jnp.sqrt(jnp.float32(H))
    keys = jax.random.split(key, 6)
    u = lambda kk, shape: jax.random.uniform(kk, shape, jnp.float32, -k, k)
    w_ih = u(keys[0], (4 * H, I))
    w_hh = u(keys[1], (4 * H, H))
    b_ih = u(keys[2], (4 * H,))
    b_hh = u(keys[3], (4 * H,))
    w_fc = u(keys[4], (n_output, H))
    b_fc = u(keys[5], (n_output,))
    return (w_ih, w_hh, b_ih, b_hh, w_fc, b_fc)


if __name__ == "__main__":
    key = jax.random.PRNGKey(0)
    k_params, k_x = jax.random.split(key)
    params = init_params(k_params)
    prepped = prepare_params(params)   # one-time weight prep (off the per-call path)

    T, B = 8, 2
    x = jax.random.normal(k_x, (T, B, n_input), jnp.float32)

    fwd = jax.jit(rnn_forward)
    out, (h_n, c_n) = fwd(x, prepped)
    jax.block_until_ready(out)
    jax.block_until_ready(h_n)
    jax.block_until_ready(c_n)

    out_ref, (h_ref, c_ref) = rnn_forward_ref(x, params, hx=None)
    assert out.shape == (T, B, n_output)
    assert h_n.shape == (n_layers, B, n_hidden)
    assert c_n.shape == (n_layers, B, n_hidden)
    assert jnp.allclose(out, out_ref, atol=1e-5, rtol=1e-5)
    assert jnp.allclose(h_n, h_ref, atol=1e-5, rtol=1e-5)
    assert jnp.allclose(c_n, c_ref, atol=1e-5, rtol=1e-5)

    print("KERNEL_OK")
</pallas_src>

<mosaic_0001>
module attributes {stable_mosaic.version = 11 : i64} {
  func.func @lstm_fc_exp_kernel(%arg0: i32, %arg1: memref<16x5xf32, #tpu.memory_space<vmem>>, %arg2: memref<5x32xf32, #tpu.memory_space<vmem>>, %arg3: memref<8x32xf32, #tpu.memory_space<vmem>>, %arg4: memref<1x32xf32, #tpu.memory_space<vmem>>, %arg5: memref<1x8xf32, #tpu.memory_space<vmem>>, %arg6: memref<1x1xf32, #tpu.memory_space<vmem>>, %arg7: memref<2x8xf32, #tpu.memory_space<vmem>>, %arg8: memref<2x8xf32, #tpu.memory_space<vmem>>, %arg9: memref<8x2x1xf32, #tpu.memory_space<vmem>>, %arg10: memref<2x8xf32, #tpu.memory_space<vmem>>, %arg11: memref<2x8xf32, #tpu.memory_space<vmem>>, %arg12: memref<16x32xf32, #tpu.memory_space<vmem>>, %arg13: memref<8x2x8xf32, #tpu.memory_space<vmem>>) attributes {dimension_semantics = [#tpu.dimension_semantics<arbitrary>], iteration_bounds = array<i64: 1>, scalar_prefetch = 0 : i64, scratch_operands = 2 : i64, tpu.core_type = #tpu.core_type<tc>, window_params = [{pipeline_mode = #tpu.pipeline_mode<synchronous>, transform_indices = @transform_0, window_bounds = array<i64: 16, 5>}, {pipeline_mode = #tpu.pipeline_mode<synchronous>, transform_indices = @transform_1, window_bounds = array<i64: 5, 32>}, {pipeline_mode = #tpu.pipeline_mode<synchronous>, transform_indices = @transform_2, window_bounds = array<i64: 8, 32>}, {pipeline_mode = #tpu.pipeline_mode<synchronous>, transform_indices = @transform_3, window_bounds = array<i64: 1, 32>}, {pipeline_mode = #tpu.pipeline_mode<synchronous>, transform_indices = @transform_4, window_bounds = array<i64: 1, 8>}, {pipeline_mode = #tpu.pipeline_mode<synchronous>, transform_indices = @transform_5, window_bounds = array<i64: 1, 1>}, {pipeline_mode = #tpu.pipeline_mode<synchronous>, transform_indices = @transform_6, window_bounds = array<i64: 2, 8>}, {pipeline_mode = #tpu.pipeline_mode<synchronous>, transform_indices = @transform_7, window_bounds = array<i64: 2, 8>}, {pipeline_mode = #tpu.pipeline_mode<synchronous>, transform_indices = @transform_8, window_bounds = array<i64: 8, 2, 1>}, {pipeline_mode = #tpu.pipeline_mode<synchronous>, transform_indices = @transform_9, window_bounds = array<i64: 2, 8>}, {pipeline_mode = #tpu.pipeline_mode<synchronous>, transform_indices = @transform_10, window_bounds = array<i64: 2, 8>}]} {
    %c0 = arith.constant 0 : index
    %c0_0 = arith.constant 0 : index
    %0 = vector.load %arg1[%c0, %c0_0] : memref<16x5xf32, #tpu.memory_space<vmem>>, vector<16x5xf32>
    %c0_1 = arith.constant 0 : index
    %c0_2 = arith.constant 0 : index
    %1 = vector.load %arg2[%c0_1, %c0_2] : memref<5x32xf32, #tpu.memory_space<vmem>>, vector<5x32xf32>
    %c0_3 = arith.constant 0 : index
    %c0_4 = arith.constant 0 : index
    %2 = vector.load %arg4[%c0_3, %c0_4] : memref<1x32xf32, #tpu.memory_space<vmem>>, vector<1x32xf32>
    %3 = vector.shape_cast %2 : vector<1x32xf32> to vector<1x32xf32>
    %4 = vector.broadcast %3 : vector<1x32xf32> to vector<16x32xf32>
    %5 = vector.extract_strided_slice %0 {offsets = [0, 0], sizes = [16, 1], strides = [1, 1]} : vector<16x5xf32> to vector<16x1xf32>
    %6 = vector.extract_strided_slice %1 {offsets = [0, 0], sizes = [1, 32], strides = [1, 1]} : vector<5x32xf32> to vector<1x32xf32>
    %7 = vector.broadcast %5 : vector<16x1xf32> to vector<16x32xf32>
    %8 = vector.broadcast %6 : vector<1x32xf32> to vector<16x32xf32>
    %9 = arith.mulf %7, %8 : vector<16x32xf32>
    %10 = vector.extract_strided_slice %0 {offsets = [0, 1], sizes = [16, 1], strides = [1, 1]} : vector<16x5xf32> to vector<16x1xf32>
    %11 = vector.extract_strided_slice %1 {offsets = [1, 0], sizes = [1, 32], strides = [1, 1]} : vector<5x32xf32> to vector<1x32xf32>
    %12 = vector.broadcast %10 : vector<16x1xf32> to vector<16x32xf32>
    %13 = vector.broadcast %11 : vector<1x32xf32> to vector<16x32xf32>
    %14 = arith.mulf %12, %13 : vector<16x32xf32>
    %15 = vector.extract_strided_slice %0 {offsets = [0, 2], sizes = [16, 1], strides = [1, 1]} : vector<16x5xf32> to vector<16x1xf32>
    %16 = vector.extract_strided_slice %1 {offsets = [2, 0], sizes = [1, 32], strides = [1, 1]} : vector<5x32xf32> to vector<1x32xf32>
    %17 = vector.broadcast %15 : vector<16x1xf32> to vector<16x32xf32>
    %18 = vector.broadcast %16 : vector<1x32xf32> to vector<16x32xf32>
    %19 = arith.mulf %17, %18 : vector<16x32xf32>
    %20 = vector.extract_strided_slice %0 {offsets = [0, 3], sizes = [16, 1], strides = [1, 1]} : vector<16x5xf32> to vector<16x1xf32>
    %21 = vector.extract_strided_slice %1 {offsets = [3, 0], sizes = [1, 32], strides = [1, 1]} : vector<5x32xf32> to vector<1x32xf32>
    %22 = vector.broadcast %20 : vector<16x1xf32> to vector<16x32xf32>
    %23 = vector.broadcast %21 : vector<1x32xf32> to vector<16x32xf32>
    %24 = arith.mulf %22, %23 : vector<16x32xf32>
    %25 = vector.extract_strided_slice %0 {offsets = [0, 4], sizes = [16, 1], strides = [1, 1]} : vector<16x5xf32> to vector<16x1xf32>
    %26 = vector.extract_strided_slice %1 {offsets = [4, 0], sizes = [1, 32], strides = [1, 1]} : vector<5x32xf32> to vector<1x32xf32>
    %27 = vector.broadcast %25 : vector<16x1xf32> to vector<16x32xf32>
    %28 = vector.broadcast %26 : vector<1x32xf32> to vector<16x32xf32>
    %29 = arith.mulf %27, %28 : vector<16x32xf32>
    %30 = arith.addf %9, %14 : vector<16x32xf32>
    %31 = arith.addf %19, %24 : vector<16x32xf32>
    %32 = arith.addf %30, %31 : vector<16x32xf32>
    %33 = arith.addf %32, %29 : vector<16x32xf32>
    %34 = arith.addf %4, %33 : vector<16x32xf32>
    %c0_5 = arith.constant 0 : index
    %c0_6 = arith.constant 0 : index
    %35 = vector.load %arg12[%c0_5, %c0_6] : memref<16x32xf32, #tpu.memory_space<vmem>>, vector<16x32xf32>
    tpu.vector_store %arg12[%c0_5, %c0_6], %34 {strides = array<i32>} : memref<16x32xf32, #tpu.memory_space<vmem>>, vector<16x32xf32>,
    %c0_7 = arith.constant 0 : index
    %c0_8 = arith.constant 0 : index
    %36 = vector.load %arg3[%c0_7, %c0_8] : memref<8x32xf32, #tpu.memory_space<vmem>>, vector<8x32xf32>
    %37 = vector.extract_strided_slice %36 {offsets = [0, 0], sizes = [1, 32], strides = [1, 1]} : vector<8x32xf32> to vector<1x32xf32>
    %38 = vector.shape_cast %37 : vector<1x32xf32> to vector<1x32xf32>
    %39 = vector.broadcast %38 : vector<1x32xf32> to vector<2x32xf32>
    %40 = vector.extract_strided_slice %36 {offsets = [1, 0], sizes = [1, 32], strides = [1, 1]} : vector<8x32xf32> to vector<1x32xf32>
    %41 = vector.shape_cast %40 : vector<1x32xf32> to vector<1x32xf32>
    %42 = vector.broadcast %41 : vector<1x32xf32> to vector<2x32xf32>
    %43 = vector.extract_strided_slice %36 {offsets = [2, 0], sizes = [1, 32], strides = [1, 1]} : vector<8x32xf32> to vector<1x32xf32>
    %44 = vector.shape_cast %43 : vector<1x32xf32> to vector<1x32xf32>
    %45 = vector.broadcast %44 : vector<1x32xf32> to vector<2x32xf32>
    %46 = vector.extract_strided_slice %36 {offsets = [3, 0], sizes = [1, 32], strides = [1, 1]} : vector<8x32xf32> to vector<1x32xf32>
    %47 = vector.shape_cast %46 : vector<1x32xf32> to vector<1x32xf32>
    %48 = vector.broadcast %47 : vector<1x32xf32> to vector<2x32xf32>
    %49 = vector.extract_strided_slice %36 {offsets = [4, 0], sizes = [1, 32], strides = [1, 1]} : vector<8x32xf32> to vector<1x32xf32>
    %50 = vector.shape_cast %49 : vector<1x32xf32> to vector<1x32xf32>
    %51 = vector.broadcast %50 : vector<1x32xf32> to vector<2x32xf32>
    %52 = vector.extract_strided_slice %36 {offsets = [5, 0], sizes = [1, 32], strides = [1, 1]} : vector<8x32xf32> to vector<1x32xf32>
    %53 = vector.shape_cast %52 : vector<1x32xf32> to vector<1x32xf32>
    %54 = vector.broadcast %53 : vector<1x32xf32> to vector<2x32xf32>
    %55 = vector.extract_strided_slice %36 {offsets = [6, 0], sizes = [1, 32], strides = [1, 1]} : vector<8x32xf32> to vector<1x32xf32>
    %56 = vector.shape_cast %55 : vector<1x32xf32> to vector<1x32xf32>
    %57 = vector.broadcast %56 : vector<1x32xf32> to vector<2x32xf32>
    %58 = vector.extract_strided_slice %36 {offsets = [7, 0], sizes = [1, 32], strides = [1, 1]} : vector<8x32xf32> to vector<1x32xf32>
    %59 = vector.shape_cast %58 : vector<1x32xf32> to vector<1x32xf32>
    %60 = vector.broadcast %59 : vector<1x32xf32> to vector<2x32xf32>
    %c0_9 = arith.constant 0 : index
    %c0_10 = arith.constant 0 : index
    %61 = vector.load %arg7[%c0_9, %c0_10] : memref<2x8xf32, #tpu.memory_space<vmem>>, vector<2x8xf32>
    %c0_11 = arith.constant 0 : index
    %c0_12 = arith.constant 0 : index
    %62 = vector.load %arg8[%c0_11, %c0_12] : memref<2x8xf32, #tpu.memory_space<vmem>>, vector<2x8xf32>
    %c0_13 = arith.constant 0 : index
    %c0_14 = arith.constant 0 : index
    %63 = vector.load %arg12[%c0_13, %c0_14] : memref<16x32xf32, #tpu.memory_space<vmem>>, vector<2x32xf32>
    %64 = vector.extract_strided_slice %61 {offsets = [0, 0], sizes = [2, 1], strides = [1, 1]} : vector<2x8xf32> to vector<2x1xf32>
    %65 = vector.broadcast %64 : vector<2x1xf32> to vector<2x32xf32>
    %66 = arith.mulf %65, %39 : vector<2x32xf32>
    %67 = vector.extract_strided_slice %61 {offsets = [0, 1], sizes = [2, 1], strides = [1, 1]} : vector<2x8xf32> to vector<2x1xf32>
    %68 = vector.broadcast %67 : vector<2x1xf32> to vector<2x32xf32>
    %69 = arith.mulf %68, %42 : vector<2x32xf32>
    %70 = vector.extract_strided_slice %61 {offsets = [0, 2], sizes = [2, 1], strides = [1, 1]} : vector<2x8xf32> to vector<2x1xf32>
    %71 = vector.broadcast %70 : vector<2x1xf32> to vector<2x32xf32>
    %72 = arith.mulf %71, %45 : vector<2x32xf32>
    %73 = vector.extract_strided_slice %61 {offsets = [0, 3], sizes = [2, 1], strides = [1, 1]} : vector<2x8xf32> to vector<2x1xf32>
    %74 = vector.broadcast %73 : vector<2x1xf32> to vector<2x32xf32>
    %75 = arith.mulf %74, %48 : vector<2x32xf32>
    %76 = vector.extract_strided_slice %61 {offsets = [0, 4], sizes = [2, 1], strides = [1, 1]} : vector<2x8xf32> to vector<2x1xf32>
    %77 = vector.broadcast %76 : vector<2x1xf32> to vector<2x32xf32>
    %78 = arith.mulf %77, %51 : vector<2x32xf32>
    %79 = vector.extract_strided_slice %61 {offsets = [0, 5], sizes = [2, 1], strides = [1, 1]} : vector<2x8xf32> to vector<2x1xf32>
    %80 = vector.broadcast %79 : vector<2x1xf32> to vector<2x32xf32>
    %81 = arith.mulf %80, %54 : vector<2x32xf32>
    %82 = vector.extract_strided_slice %61 {offsets = [0, 6], sizes = [2, 1], strides = [1, 1]} : vector<2x8xf32> to vector<2x1xf32>
    %83 = vector.broadcast %82 : vector<2x1xf32> to vector<2x32xf32>
    %84 = arith.mulf %83, %57 : vector<2x32xf32>
    %85 = vector.extract_strided_slice %61 {offsets = [0, 7], sizes = [2, 1], strides = [1, 1]} : vector<2x8xf32> to vector<2x1xf32>
    %86 = vector.broadcast %85 : vector<2x1xf32> to vector<2x32xf32>
    %87 = arith.mulf %86, %60 : vector<2x32xf32>
    %88 = arith.addf %66, %69 : vector<2x32xf32>
    %89 = arith.addf %72, %75 : vector<2x32xf32>
    %90 = arith.addf %78, %81 : vector<2x32xf32>
    %91 = arith.addf %84, %87 : vector<2x32xf32>
    %92 = arith.addf %88, %89 : vector<2x32xf32>
    %93 = arith.addf %90, %91 : vector<2x32xf32>
    %94 = arith.addf %92, %93 : vector<2x32xf32>
    %95 = arith.addf %63, %94 : vector<2x32xf32>
    %96 = math.tanh %95 : vector<2x32xf32>
    %97 = vector.extract_strided_slice %96 {offsets = [0, 0], sizes = [2, 24], strides = [1, 1]} : vector<2x32xf32> to vector<2x24xf32>
    %cst = arith.constant 5.000000e-01 : f32
    %98 = vector.broadcast %cst : f32 to vector<2x24xf32>
    %99 = arith.mulf %98, %97 : vector<2x24xf32>
    %cst_15 = arith.constant 5.000000e-01 : f32
    %100 = vector.broadcast %cst_15 : f32 to vector<2x24xf32>
    %101 = arith.addf %99, %100 : vector<2x24xf32>
    %102 = vector.extract_strided_slice %101 {offsets = [0, 0], sizes = [2, 8], strides = [1, 1]} : vector<2x24xf32> to vector<2x8xf32>
    %103 = vector.extract_strided_slice %101 {offsets = [0, 8], sizes = [2, 8], strides = [1, 1]} : vector<2x24xf32> to vector<2x8xf32>
    %104 = vector.extract_strided_slice %101 {offsets = [0, 16], sizes = [2, 8], strides = [1, 1]} : vector<2x24xf32> to vector<2x8xf32>
    %105 = vector.extract_strided_slice %96 {offsets = [0, 24], sizes = [2, 8], strides = [1, 1]} : vector<2x32xf32> to vector<2x8xf32>
    %106 = arith.mulf %103, %62 : vector<2x8xf32>
    %107 = arith.mulf %102, %105 : vector<2x8xf32>
    %108 = arith.addf %106, %107 : vector<2x8xf32>
    %109 = math.tanh %108 : vector<2x8xf32>
    %110 = arith.mulf %104, %109 : vector<2x8xf32>
    %c0_16 = arith.constant 0 : index
    %c0_17 = arith.constant 0 : index
    %c0_18 = arith.constant 0 : index
    %111 = vector.load %arg13[%c0_16, %c0_17, %c0_18] : memref<8x2x8xf32, #tpu.memory_space<vmem>>, vector<1x2x8xf32>
    %112 = vector.shape_cast %111 : vector<1x2x8xf32> to vector<2x8xf32>
    %113 = vector.shape_cast %110 : vector<2x8xf32> to vector<1x2x8xf32>
    tpu.vector_store %arg13[%c0_16, %c0_17, %c0_18], %113 {strides = array<i32>} : memref<8x2x8xf32, #tpu.memory_space<vmem>>, vector<1x2x8xf32>,
    %c2 = arith.constant 2 : index
    %c0_19 = arith.constant 0 : index
    %114 = vector.load %arg12[%c2, %c0_19] : memref<16x32xf32, #tpu.memory_space<vmem>>, vector<2x32xf32>
    %115 = vector.extract_strided_slice %110 {offsets = [0, 0], sizes = [2, 1], strides = [1, 1]} : vector<2x8xf32> to vector<2x1xf32>
    %116 = vector.broadcast %115 : vector<2x1xf32> to vector<2x32xf32>
    %117 = arith.mulf %116, %39 : vector<2x32xf32>
    %118 = vector.extract_strided_slice %110 {offsets = [0, 1], sizes = [2, 1], strides = [1, 1]} : vector<2x8xf32> to vector<2x1xf32>
    %119 = vector.broadcast %118 : vector<2x1xf32> to vector<2x32xf32>
    %120 = arith.mulf %119, %42 : vector<2x32xf32>
    %121 = vector.extract_strided_slice %110 {offsets = [0, 2], sizes = [2, 1], strides = [1, 1]} : vector<2x8xf32> to vector<2x1xf32>
    %122 = vector.broadcast %121 : vector<2x1xf32> to vector<2x32xf32>
    %123 = arith.mulf %122, %45 : vector<2x32xf32>
    %124 = vector.extract_strided_slice %110 {offsets = [0, 3], sizes = [2, 1], strides = [1, 1]} : vector<2x8xf32> to vector<2x1xf32>
    %125 = vector.broadcast %124 : vector<2x1xf32> to vector<2x32xf32>
    %126 = arith.mulf %125, %48 : vector<2x32xf32>
    %127 = vector.extract_strided_slice %110 {offsets = [0, 4], sizes = [2, 1], strides = [1, 1]} : vector<2x8xf32> to vector<2x1xf32>
    %128 = vector.broadcast %127 : vector<2x1xf32> to vector<2x32xf32>
    %129 = arith.mulf %128, %51 : vector<2x32xf32>
    %130 = vector.extract_strided_slice %110 {offsets = [0, 5], sizes = [2, 1], strides = [1, 1]} : vector<2x8xf32> to vector<2x1xf32>
    %131 = vector.broadcast %130 : vector<2x1xf32> to vector<2x32xf32>
    %132 = arith.mulf %131, %54 : vector<2x32xf32>
    %133 = vector.extract_strided_slice %110 {offsets = [0, 6], sizes = [2, 1], strides = [1, 1]} : vector<2x8xf32> to vector<2x1xf32>
    %134 = vector.broadcast %133 : vector<2x1xf32> to vector<2x32xf32>
    %135 = arith.mulf %134, %57 : vector<2x32xf32>
    %136 = vector.extract_strided_slice %110 {offsets = [0, 7], sizes = [2, 1], strides = [1, 1]} : vector<2x8xf32> to vector<2x1xf32>
    %137 = vector.broadcast %136 : vector<2x1xf32> to vector<2x32xf32>
    %138 = arith.mulf %137, %60 : vector<2x32xf32>
    %139 = arith.addf %117, %120 : vector<2x32xf32>
    %140 = arith.addf %123, %126 : vector<2x32xf32>
    %141 = arith.addf %129, %132 : vector<2x32xf32>
    %142 = arith.addf %135, %138 : vector<2x32xf32>
    %143 = arith.addf %139, %140 : vector<2x32xf32>
    %144 = arith.addf %141, %142 : vector<2x32xf32>
    %145 = arith.addf %143, %144 : vector<2x32xf32>
    %146 = arith.addf %114, %145 : vector<2x32xf32>
    %147 = math.tanh %146 : vector<2x32xf32>
    %148 = vector.extract_strided_slice %147 {offsets = [0, 0], sizes = [2, 24], strides = [1, 1]} : vector<2x32xf32> to vector<2x24xf32>
    %cst_20 = arith.constant 5.000000e-01 : f32
    %149 = vector.broadcast %cst_20 : f32 to vector<2x24xf32>
    %150 = arith.mulf %149, %148 : vector<2x24xf32>
    %cst_21 = arith.constant 5.000000e-01 : f32
    %151 = vector.broadcast %cst_21 : f32 to vector<2x24xf32>
    %152 = arith.addf %150, %151 : vector<2x24xf32>
    %153 = vector.extract_strided_slice %152 {offsets = [0, 0], sizes = [2, 8], strides = [1, 1]} : vector<2x24xf32> to vector<2x8xf32>
    %154 = vector.extract_strided_slice %152 {offsets = [0, 8], sizes = [2, 8], strides = [1, 1]} : vector<2x24xf32> to vector<2x8xf32>
    %155 = vector.extract_strided_slice %152 {offsets = [0, 16], sizes = [2, 8], strides = [1, 1]} : vector<2x24xf32> to vector<2x8xf32>
    %156 = vector.extract_strided_slice %147 {offsets = [0, 24], sizes = [2, 8], strides = [1, 1]} : vector<2x32xf32> to vector<2x8xf32>
    %157 = arith.mulf %154, %108 : vector<2x8xf32>
    %158 = arith.mulf %153, %156 : vector<2x8xf32>
    %159 = arith.addf %157, %158 : vector<2x8xf32>
    %160 = math.tanh %159 : vector<2x8xf32>
    %161 = arith.mulf %155, %160 : vector<2x8xf32>
    %c1 = arith.constant 1 : index
    %c0_22 = arith.constant 0 : index
    %c0_23 = arith.constant 0 : index
    %162 = vector.load %arg13[%c1, %c0_22, %c0_23] : memref<8x2x8xf32, #tpu.memory_space<vmem>>, vector<1x2x8xf32>
    %163 = vector.shape_cast %162 : vector<1x2x8xf32> to vector<2x8xf32>
    %164 = vector.shape_cast %161 : vector<2x8xf32> to vector<1x2x8xf32>
    tpu.vector_store %arg13[%c1, %c0_22, %c0_23], %164 {strides = array<i32>} : memref<8x2x8xf32, #tpu.memory_space<vmem>>, vector<1x2x8xf32>,
    %c4 = arith.constant 4 : index
    %c0_24 = arith.constant 0 : index
    %165 = vector.load %arg12[%c4, %c0_24] : memref<16x32xf32, #tpu.memory_space<vmem>>, vector<2x32xf32>
    %166 = vector.extract_strided_slice %161 {offsets = [0, 0], sizes = [2, 1], strides = [1, 1]} : vector<2x8xf32> to vector<2x1xf32>
    %167 = vector.broadcast %166 : vector<2x1xf32> to vector<2x32xf32>
    %168 = arith.mulf %167, %39 : vector<2x32xf32>
    %169 = vector.extract_strided_slice %161 {offsets = [0, 1], sizes = [2, 1], strides = [1, 1]} : vector<2x8xf32> to vector<2x1xf32>
    %170 = vector.broadcast %169 : vector<2x1xf32> to vector<2x32xf32>
    %171 = arith.mulf %170, %42 : vector<2x32xf32>
    %172 = vector.extract_strided_slice %161 {offsets = [0, 2], sizes = [2, 1], strides = [1, 1]} : vector<2x8xf32> to vector<2x1xf32>
    %173 = vector.broadcast %172 : vector<2x1xf32> to vector<2x32xf32>
    %174 = arith.mulf %173, %45 : vector<2x32xf32>
    %175 = vector.extract_strided_slice %161 {offsets = [0, 3], sizes = [2, 1], strides = [1, 1]} : vector<2x8xf32> to vector<2x1xf32>
    %176 = vector.broadcast %175 : vector<2x1xf32> to vector<2x32xf32>
    %177 = arith.mulf %176, %48 : vector<2x32xf32>
    %178 = vector.extract_strided_slice %161 {offsets = [0, 4], sizes = [2, 1], strides = [1, 1]} : vector<2x8xf32> to vector<2x1xf32>
    %179 = vector.broadcast %178 : vector<2x1xf32> to vector<2x32xf32>
    %180 = arith.mulf %179, %51 : vector<2x32xf32>
    %181 = vector.extract_strided_slice %161 {offsets = [0, 5], sizes = [2, 1], strides = [1, 1]} : vector<2x8xf32> to vector<2x1xf32>
    %182 = vector.broadcast %181 : vector<2x1xf32> to vector<2x32xf32>
    %183 = arith.mulf %182, %54 : vector<2x32xf32>
    %184 = vector.extract_strided_slice %161 {offsets = [0, 6], sizes = [2, 1], strides = [1, 1]} : vector<2x8xf32> to vector<2x1xf32>
    %185 = vector.broadcast %184 : vector<2x1xf32> to vector<2x32xf32>
    %186 = arith.mulf %185, %57 : vector<2x32xf32>
    %187 = vector.extract_strided_slice %161 {offsets = [0, 7], sizes = [2, 1], strides = [1, 1]} : vector<2x8xf32> to vector<2x1xf32>
    %188 = vector.broadcast %187 : vector<2x1xf32> to vector<2x32xf32>
    %189 = arith.mulf %188, %60 : vector<2x32xf32>
    %190 = arith.addf %168, %171 : vector<2x32xf32>
    %191 = arith.addf %174, %177 : vector<2x32xf32>
    %192 = arith.addf %180, %183 : vector<2x32xf32>
    %193 = arith.addf %186, %189 : vector<2x32xf32>
    %194 = arith.addf %190, %191 : vector<2x32xf32>
    %195 = arith.addf %192, %193 : vector<2x32xf32>
    %196 = arith.addf %194, %195 : vector<2x32xf32>
    %197 = arith.addf %165, %196 : vector<2x32xf32>
    %198 = math.tanh %197 : vector<2x32xf32>
    %199 = vector.extract_strided_slice %198 {offsets = [0, 0], sizes = [2, 24], strides = [1, 1]} : vector<2x32xf32> to vector<2x24xf32>
    %cst_25 = arith.constant 5.000000e-01 : f32
    %200 = vector.broadcast %cst_25 : f32 to vector<2x24xf32>
    %201 = arith.mulf %200, %199 : vector<2x24xf32>
    %cst_26 = arith.constant 5.000000e-01 : f32
    %202 = vector.broadcast %cst_26 : f32 to vector<2x24xf32>
    %203 = arith.addf %201, %202 : vector<2x24xf32>
    %204 = vector.extract_strided_slice %203 {offsets = [0, 0], sizes = [2, 8], strides = [1, 1]} : vector<2x24xf32> to vector<2x8xf32>
    %205 = vector.extract_strided_slice %203 {offsets = [0, 8], sizes = [2, 8], strides = [1, 1]} : vector<2x24xf32> to vector<2x8xf32>
    %206 = vector.extract_strided_slice %203 {offsets = [0, 16], sizes = [2, 8], strides = [1, 1]} : vector<2x24xf32> to vector<2x8xf32>
    %207 = vector.extract_strided_slice %198 {offsets = [0, 24], sizes = [2, 8], strides = [1, 1]} : vector<2x32xf32> to vector<2x8xf32>
    %208 = arith.mulf %205, %159 : vector<2x8xf32>
    %209 = arith.mulf %204, %207 : vector<2x8xf32>
    %210 = arith.addf %208, %209 : vector<2x8xf32>
    %211 = math.tanh %210 : vector<2x8xf32>
    %212 = arith.mulf %206, %211 : vector<2x8xf32>
    %c2_27 = arith.constant 2 : index
    %c0_28 = arith.constant 0 : index
    %c0_29 = arith.constant 0 : index
    %213 = vector.load %arg13[%c2_27, %c0_28, %c0_29] : memref<8x2x8xf32, #tpu.memory_space<vmem>>, vector<1x2x8xf32>
    %214 = vector.shape_cast %213 : vector<1x2x8xf32> to vector<2x8xf32>
    %215 = vector.shape_cast %212 : vector<2x8xf32> to vector<1x2x8xf32>
    tpu.vector_store %arg13[%c2_27, %c0_28, %c0_29], %215 {strides = array<i32>} : memref<8x2x8xf32, #tpu.memory_space<vmem>>, vector<1x2x8xf32>,
    %c6 = arith.constant 6 : index
    %c0_30 = arith.constant 0 : index
    %216 = vector.load %arg12[%c6, %c0_30] : memref<16x32xf32, #tpu.memory_space<vmem>>, vector<2x32xf32>
    %217 = vector.extract_strided_slice %212 {offsets = [0, 0], sizes = [2, 1], strides = [1, 1]} : vector<2x8xf32> to vector<2x1xf32>
    %218 = vector.broadcast %217 : vector<2x1xf32> to vector<2x32xf32>
    %219 = arith.mulf %218, %39 : vector<2x32xf32>
    %220 = vector.extract_strided_slice %212 {offsets = [0, 1], sizes = [2, 1], strides = [1, 1]} : vector<2x8xf32> to vector<2x1xf32>
    %221 = vector.broadcast %220 : vector<2x1xf32> to vector<2x32xf32>
    %222 = arith.mulf %221, %42 : vector<2x32xf32>
    %223 = vector.extract_strided_slice %212 {offsets = [0, 2], sizes = [2, 1], strides = [1, 1]} : vector<2x8xf32> to vector<2x1xf32>
    %224 = vector.broadcast %223 : vector<2x1xf32> to vector<2x32xf32>
    %225 = arith.mulf %224, %45 : vector<2x32xf32>
    %226 = vector.extract_strided_slice %212 {offsets = [0, 3], sizes = [2, 1], strides = [1, 1]} : vector<2x8xf32> to vector<2x1xf32>
    %227 = vector.broadcast %226 : vector<2x1xf32> to vector<2x32xf32>
    %228 = arith.mulf %227, %48 : vector<2x32xf32>
    %229 = vector.extract_strided_slice %212 {offsets = [0, 4], sizes = [2, 1], strides = [1, 1]} : vector<2x8xf32> to vector<2x1xf32>
    %230 = vector.broadcast %229 : vector<2x1xf32> to vector<2x32xf32>
    %231 = arith.mulf %230, %51 : vector<2x32xf32>
    %232 = vector.extract_strided_slice %212 {offsets = [0, 5], sizes = [2, 1], strides = [1, 1]} : vector<2x8xf32> to vector<2x1xf32>
    %233 = vector.broadcast %232 : vector<2x1xf32> to vector<2x32xf32>
    %234 = arith.mulf %233, %54 : vector<2x32xf32>
    %235 = vector.extract_strided_slice %212 {offsets = [0, 6], sizes = [2, 1], strides = [1, 1]} : vector<2x8xf32> to vector<2x1xf32>
    %236 = vector.broadcast %235 : vector<2x1xf32> to vector<2x32xf32>
    %237 = arith.mulf %236, %57 : vector<2x32xf32>
    %238 = vector.extract_strided_slice %212 {offsets = [0, 7], sizes = [2, 1], strides = [1, 1]} : vector<2x8xf32> to vector<2x1xf32>
    %239 = vector.broadcast %238 : vector<2x1xf32> to vector<2x32xf32>
    %240 = arith.mulf %239, %60 : vector<2x32xf32>
    %241 = arith.addf %219, %222 : vector<2x32xf32>
    %242 = arith.addf %225, %228 : vector<2x32xf32>
    %243 = arith.addf %231, %234 : vector<2x32xf32>
    %244 = arith.addf %237, %240 : vector<2x32xf32>
    %245 = arith.addf %241, %242 : vector<2x32xf32>
    %246 = arith.addf %243, %244 : vector<2x32xf32>
    %247 = arith.addf %245, %246 : vector<2x32xf32>
    %248 = arith.addf %216, %247 : vector<2x32xf32>
    %249 = math.tanh %248 : vector<2x32xf32>
    %250 = vector.extract_strided_slice %249 {offsets = [0, 0], sizes = [2, 24], strides = [1, 1]} : vector<2x32xf32> to vector<2x24xf32>
    %cst_31 = arith.constant 5.000000e-01 : f32
    %251 = vector.broadcast %cst_31 : f32 to vector<2x24xf32>
    %252 = arith.mulf %251, %250 : vector<2x24xf32>
    %cst_32 = arith.constant 5.000000e-01 : f32
    %253 = vector.broadcast %cst_32 : f32 to vector<2x24xf32>
    %254 = arith.addf %252, %253 : vector<2x24xf32>
    %255 = vector.extract_strided_slice %254 {offsets = [0, 0], sizes = [2, 8], strides = [1, 1]} : vector<2x24xf32> to vector<2x8xf32>
    %256 = vector.extract_strided_slice %254 {offsets = [0, 8], sizes = [2, 8], strides = [1, 1]} : vector<2x24xf32> to vector<2x8xf32>
    %257 = vector.extract_strided_slice %254 {offsets = [0, 16], sizes = [2, 8], strides = [1, 1]} : vector<2x24xf32> to vector<2x8xf32>
    %258 = vector.extract_strided_slice %249 {offsets = [0, 24], sizes = [2, 8], strides = [1, 1]} : vector<2x32xf32> to vector<2x8xf32>
    %259 = arith.mulf %256, %210 : vector<2x8xf32>
    %260 = arith.mulf %255, %258 : vector<2x8xf32>
    %261 = arith.addf %259, %260 : vector<2x8xf32>
    %262 = math.tanh %261 : vector<2x8xf32>
    %263 = arith.mulf %257, %262 : vector<2x8xf32>
    %c3 = arith.constant 3 : index
    %c0_33 = arith.constant 0 : index
    %c0_34 = arith.constant 0 : index
    %264 = vector.load %arg13[%c3, %c0_33, %c0_34] : memref<8x2x8xf32, #tpu.memory_space<vmem>>, vector<1x2x8xf32>
    %265 = vector.shape_cast %264 : vector<1x2x8xf32> to vector<2x8xf32>
    %266 = vector.shape_cast %263 : vector<2x8xf32> to vector<1x2x8xf32>
    tpu.vector_store %arg13[%c3, %c0_33, %c0_34], %266 {strides = array<i32>} : memref<8x2x8xf32, #tpu.memory_space<vmem>>, vector<1x2x8xf32>,
    %c8 = arith.constant 8 : index
    %c0_35 = arith.constant 0 : index
    %267 = vector.load %arg12[%c8, %c0_35] : memref<16x32xf32, #tpu.memory_space<vmem>>, vector<2x32xf32>
    %268 = vector.extract_strided_slice %263 {offsets = [0, 0], sizes = [2, 1], strides = [1, 1]} : vector<2x8xf32> to vector<2x1xf32>
    %269 = vector.broadcast %268 : vector<2x1xf32> to vector<2x32xf32>
    %270 = arith.mulf %269, %39 : vector<2x32xf32>
    %271 = vector.extract_strided_slice %263 {offsets = [0, 1], sizes = [2, 1], strides = [1, 1]} : vector<2x8xf32> to vector<2x1xf32>
    %272 = vector.broadcast %271 : vector<2x1xf32> to vector<2x32xf32>
    %273 = arith.mulf %272, %42 : vector<2x32xf32>
    %274 = vector.extract_strided_slice %263 {offsets = [0, 2], sizes = [2, 1], strides = [1, 1]} : vector<2x8xf32> to vector<2x1xf32>
    %275 = vector.broadcast %274 : vector<2x1xf32> to vector<2x32xf32>
    %276 = arith.mulf %275, %45 : vector<2x32xf32>
    %277 = vector.extract_strided_slice %263 {offsets = [0, 3], sizes = [2, 1], strides = [1, 1]} : vector<2x8xf32> to vector<2x1xf32>
    %278 = vector.broadcast %277 : vector<2x1xf32> to vector<2x32xf32>
    %279 = arith.mulf %278, %48 : vector<2x32xf32>
    %280 = vector.extract_strided_slice %263 {offsets = [0, 4], sizes = [2, 1], strides = [1, 1]} : vector<2x8xf32> to vector<2x1xf32>
    %281 = vector.broadcast %280 : vector<2x1xf32> to vector<2x32xf32>
    %282 = arith.mulf %281, %51 : vector<2x32xf32>
    %283 = vector.extract_strided_slice %263 {offsets = [0, 5], sizes = [2, 1], strides = [1, 1]} : vector<2x8xf32> to vector<2x1xf32>
    %284 = vector.broadcast %283 : vector<2x1xf32> to vector<2x32xf32>
    %285 = arith.mulf %284, %54 : vector<2x32xf32>
    %286 = vector.extract_strided_slice %263 {offsets = [0, 6], sizes = [2, 1], strides = [1, 1]} : vector<2x8xf32> to vector<2x1xf32>
    %287 = vector.broadcast %286 : vector<2x1xf32> to vector<2x32xf32>
    %288 = arith.mulf %287, %57 : vector<2x32xf32>
    %289 = vector.extract_strided_slice %263 {offsets = [0, 7], sizes = [2, 1], strides = [1, 1]} : vector<2x8xf32> to vector<2x1xf32>
    %290 = vector.broadcast %289 : vector<2x1xf32> to vector<2x32xf32>
    %291 = arith.mulf %290, %60 : vector<2x32xf32>
    %292 = arith.addf %270, %273 : vector<2x32xf32>
    %293 = arith.addf %276, %279 : vector<2x32xf32>
    %294 = arith.addf %282, %285 : vector<2x32xf32>
    %295 = arith.addf %288, %291 : vector<2x32xf32>
    %296 = arith.addf %292, %293 : vector<2x32xf32>
    %297 = arith.addf %294, %295 : vector<2x32xf32>
    %298 = arith.addf %296, %297 : vector<2x32xf32>
    %299 = arith.addf %267, %298 : vector<2x32xf32>
    %300 = math.tanh %299 : vector<2x32xf32>
    %301 = vector.extract_strided_slice %300 {offsets = [0, 0], sizes = [2, 24], strides = [1, 1]} : vector<2x32xf32> to vector<2x24xf32>
    %cst_36 = arith.constant 5.000000e-01 : f32
    %302 = vector.broadcast %cst_36 : f32 to vector<2x24xf32>
    %303 = arith.mulf %302, %301 : vector<2x24xf32>
    %cst_37 = arith.constant 5.000000e-01 : f32
    %304 = vector.broadcast %cst_37 : f32 to vector<2x24xf32>
    %305 = arith.addf %303, %304 : vector<2x24xf32>
    %306 = vector.extract_strided_slice %305 {offsets = [0, 0], sizes = [2, 8], strides = [1, 1]} : vector<2x24xf32> to vector<2x8xf32>
    %307 = vector.extract_strided_slice %305 {offsets = [0, 8], sizes = [2, 8], strides = [1, 1]} : vector<2x24xf32> to vector<2x8xf32>
    %308 = vector.extract_strided_slice %305 {offsets = [0, 16], sizes = [2, 8], strides = [1, 1]} : vector<2x24xf32> to vector<2x8xf32>
    %309 = vector.extract_strided_slice %300 {offsets = [0, 24], sizes = [2, 8], strides = [1, 1]} : vector<2x32xf32> to vector<2x8xf32>
    %310 = arith.mulf %307, %261 : vector<2x8xf32>
    %311 = arith.mulf %306, %309 : vector<2x8xf32>
    %312 = arith.addf %310, %311 : vector<2x8xf32>
    %313 = math.tanh %312 : vector<2x8xf32>
    %314 = arith.mulf %308, %313 : vector<2x8xf32>
    %c4_38 = arith.constant 4 : index
    %c0_39 = arith.constant 0 : index
    %c0_40 = arith.constant 0 : index
    %315 = vector.load %arg13[%c4_38, %c0_39, %c0_40] : memref<8x2x8xf32, #tpu.memory_space<vmem>>, vector<1x2x8xf32>
    %316 = vector.shape_cast %315 : vector<1x2x8xf32> to vector<2x8xf32>
    %317 = vector.shape_cast %314 : vector<2x8xf32> to vector<1x2x8xf32>
    tpu.vector_store %arg13[%c4_38, %c0_39, %c0_40], %317 {strides = array<i32>} : memref<8x2x8xf32, #tpu.memory_space<vmem>>, vector<1x2x8xf32>,
    %c10 = arith.constant 10 : index
    %c0_41 = arith.constant 0 : index
    %318 = vector.load %arg12[%c10, %c0_41] : memref<16x32xf32, #tpu.memory_space<vmem>>, vector<2x32xf32>
    %319 = vector.extract_strided_slice %314 {offsets = [0, 0], sizes = [2, 1], strides = [1, 1]} : vector<2x8xf32> to vector<2x1xf32>
    %320 = vector.broadcast %319 : vector<2x1xf32> to vector<2x32xf32>
    %321 = arith.mulf %320, %39 : vector<2x32xf32>
    %322 = vector.extract_strided_slice %314 {offsets = [0, 1], sizes = [2, 1], strides = [1, 1]} : vector<2x8xf32> to vector<2x1xf32>
    %323 = vector.broadcast %322 : vector<2x1xf32> to vector<2x32xf32>
    %324 = arith.mulf %323, %42 : vector<2x32xf32>
    %325 = vector.extract_strided_slice %314 {offsets = [0, 2], sizes = [2, 1], strides = [1, 1]} : vector<2x8xf32> to vector<2x1xf32>
    %326 = vector.broadcast %325 : vector<2x1xf32> to vector<2x32xf32>
    %327 = arith.mulf %326, %45 : vector<2x32xf32>
    %328 = vector.extract_strided_slice %314 {offsets = [0, 3], sizes = [2, 1], strides = [1, 1]} : vector<2x8xf32> to vector<2x1xf32>
    %329 = vector.broadcast %328 : vector<2x1xf32> to vector<2x32xf32>
    %330 = arith.mulf %329, %48 : vector<2x32xf32>
    %331 = vector.extract_strided_slice %314 {offsets = [0, 4], sizes = [2, 1], strides = [1, 1]} : vector<2x8xf32> to vector<2x1xf32>
    %332 = vector.broadcast %331 : vector<2x1xf32> to vector<2x32xf32>
    %333 = arith.mulf %332, %51 : vector<2x32xf32>
    %334 = vector.extract_strided_slice %314 {offsets = [0, 5], sizes = [2, 1], strides = [1, 1]} : vector<2x8xf32> to vector<2x1xf32>
    %335 = vector.broadcast %334 : vector<2x1xf32> to vector<2x32xf32>
    %336 = arith.mulf %335, %54 : vector<2x32xf32>
    %337 = vector.extract_strided_slice %314 {offsets = [0, 6], sizes = [2, 1], strides = [1, 1]} : vector<2x8xf32> to vector<2x1xf32>
    %338 = vector.broadcast %337 : vector<2x1xf32> to vector<2x32xf32>
    %339 = arith.mulf %338, %57 : vector<2x32xf32>
    %340 = vector.extract_strided_slice %314 {offsets = [0, 7], sizes = [2, 1], strides = [1, 1]} : vector<2x8xf32> to vector<2x1xf32>
    %341 = vector.broadcast %340 : vector<2x1xf32> to vector<2x32xf32>
    %342 = arith.mulf %341, %60 : vector<2x32xf32>
    %343 = arith.addf %321, %324 : vector<2x32xf32>
    %344 = arith.addf %327, %330 : vector<2x32xf32>
    %345 = arith.addf %333, %336 : vector<2x32xf32>
    %346 = arith.addf %339, %342 : vector<2x32xf32>
    %347 = arith.addf %343, %344 : vector<2x32xf32>
    %348 = arith.addf %345, %346 : vector<2x32xf32>
    %349 = arith.addf %347, %348 : vector<2x32xf32>
    %350 = arith.addf %318, %349 : vector<2x32xf32>
    %351 = math.tanh %350 : vector<2x32xf32>
    %352 = vector.extract_strided_slice %351 {offsets = [0, 0], sizes = [2, 24], strides = [1, 1]} : vector<2x32xf32> to vector<2x24xf32>
    %cst_42 = arith.constant 5.000000e-01 : f32
    %353 = vector.broadcast %cst_42 : f32 to vector<2x24xf32>
    %354 = arith.mulf %353, %352 : vector<2x24xf32>
    %cst_43 = arith.constant 5.000000e-01 : f32
    %355 = vector.broadcast %cst_43 : f32 to vector<2x24xf32>
    %356 = arith.addf %354, %355 : vector<2x24xf32>
    %357 = vector.extract_strided_slice %356 {offsets = [0, 0], sizes = [2, 8], strides = [1, 1]} : vector<2x24xf32> to vector<2x8xf32>
    %358 = vector.extract_strided_slice %356 {offsets = [0, 8], sizes = [2, 8], strides = [1, 1]} : vector<2x24xf32> to vector<2x8xf32>
    %359 = vector.extract_strided_slice %356 {offsets = [0, 16], sizes = [2, 8], strides = [1, 1]} : vector<2x24xf32> to vector<2x8xf32>
    %360 = vector.extract_strided_slice %351 {offsets = [0, 24], sizes = [2, 8], strides = [1, 1]} : vector<2x32xf32> to vector<2x8xf32>
    %361 = arith.mulf %358, %312 : vector<2x8xf32>
    %362 = arith.mulf %357, %360 : vector<2x8xf32>
    %363 = arith.addf %361, %362 : vector<2x8xf32>
    %364 = math.tanh %363 : vector<2x8xf32>
    %365 = arith.mulf %359, %364 : vector<2x8xf32>
    %c5 = arith.constant 5 : index
    %c0_44 = arith.constant 0 : index
    %c0_45 = arith.constant 0 : index
    %366 = vector.load %arg13[%c5, %c0_44, %c0_45] : memref<8x2x8xf32, #tpu.memory_space<vmem>>, vector<1x2x8xf32>
    %367 = vector.shape_cast %366 : vector<1x2x8xf32> to vector<2x8xf32>
    %368 = vector.shape_cast %365 : vector<2x8xf32> to vector<1x2x8xf32>
    tpu.vector_store %arg13[%c5, %c0_44, %c0_45], %368 {strides = array<i32>} : memref<8x2x8xf32, #tpu.memory_space<vmem>>, vector<1x2x8xf32>,
    %c12 = arith.constant 12 : index
    %c0_46 = arith.constant 0 : index
    %369 = vector.load %arg12[%c12, %c0_46] : memref<16x32xf32, #tpu.memory_space<vmem>>, vector<2x32xf32>
    %370 = vector.extract_strided_slice %365 {offsets = [0, 0], sizes = [2, 1], strides = [1, 1]} : vector<2x8xf32> to vector<2x1xf32>
    %371 = vector.broadcast %370 : vector<2x1xf32> to vector<2x32xf32>
    %372 = arith.mulf %371, %39 : vector<2x32xf32>
    %373 = vector.extract_strided_slice %365 {offsets = [0, 1], sizes = [2, 1], strides = [1, 1]} : vector<2x8xf32> to vector<2x1xf32>
    %374 = vector.broadcast %373 : vector<2x1xf32> to vector<2x32xf32>
    %375 = arith.mulf %374, %42 : vector<2x32xf32>
    %376 = vector.extract_strided_slice %365 {offsets = [0, 2], sizes = [2, 1], strides = [1, 1]} : vector<2x8xf32> to vector<2x1xf32>
    %377 = vector.broadcast %376 : vector<2x1xf32> to vector<2x32xf32>
    %378 = arith.mulf %377, %45 : vector<2x32xf32>
    %379 = vector.extract_strided_slice %365 {offsets = [0, 3], sizes = [2, 1], strides = [1, 1]} : vector<2x8xf32> to vector<2x1xf32>
    %380 = vector.broadcast %379 : vector<2x1xf32> to vector<2x32xf32>
    %381 = arith.mulf %380, %48 : vector<2x32xf32>
    %382 = vector.extract_strided_slice %365 {offsets = [0, 4], sizes = [2, 1], strides = [1, 1]} : vector<2x8xf32> to vector<2x1xf32>
    %383 = vector.broadcast %382 : vector<2x1xf32> to vector<2x32xf32>
    %384 = arith.mulf %383, %51 : vector<2x32xf32>
    %385 = vector.extract_strided_slice %365 {offsets = [0, 5], sizes = [2, 1], strides = [1, 1]} : vector<2x8xf32> to vector<2x1xf32>
    %386 = vector.broadcast %385 : vector<2x1xf32> to vector<2x32xf32>
    %387 = arith.mulf %386, %54 : vector<2x32xf32>
    %388 = vector.extract_strided_slice %365 {offsets = [0, 6], sizes = [2, 1], strides = [1, 1]} : vector<2x8xf32> to vector<2x1xf32>
    %389 = vector.broadcast %388 : vector<2x1xf32> to vector<2x32xf32>
    %390 = arith.mulf %389, %57 : vector<2x32xf32>
    %391 = vector.extract_strided_slice %365 {offsets = [0, 7], sizes = [2, 1], strides = [1, 1]} : vector<2x8xf32> to vector<2x1xf32>
    %392 = vector.broadcast %391 : vector<2x1xf32> to vector<2x32xf32>
    %393 = arith.mulf %392, %60 : vector<2x32xf32>
    %394 = arith.addf %372, %375 : vector<2x32xf32>
    %395 = arith.addf %378, %381 : vector<2x32xf32>
    %396 = arith.addf %384, %387 : vector<2x32xf32>
    %397 = arith.addf %390, %393 : vector<2x32xf32>
    %398 = arith.addf %394, %395 : vector<2x32xf32>
    %399 = arith.addf %396, %397 : vector<2x32xf32>
    %400 = arith.addf %398, %399 : vector<2x32xf32>
    %401 = arith.addf %369, %400 : vector<2x32xf32>
    %402 = math.tanh %401 : vector<2x32xf32>
    %403 = vector.extract_strided_slice %402 {offsets = [0, 0], sizes = [2, 24], strides = [1, 1]} : vector<2x32xf32> to vector<2x24xf32>
    %cst_47 = arith.constant 5.000000e-01 : f32
    %404 = vector.broadcast %cst_47 : f32 to vector<2x24xf32>
    %405 = arith.mulf %404, %403 : vector<2x24xf32>
    %cst_48 = arith.constant 5.000000e-01 : f32
    %406 = vector.broadcast %cst_48 : f32 to vector<2x24xf32>
    %407 = arith.addf %405, %406 : vector<2x24xf32>
    %408 = vector.extract_strided_slice %407 {offsets = [0, 0], sizes = [2, 8], strides = [1, 1]} : vector<2x24xf32> to vector<2x8xf32>
    %409 = vector.extract_strided_slice %407 {offsets = [0, 8], sizes = [2, 8], strides = [1, 1]} : vector<2x24xf32> to vector<2x8xf32>
    %410 = vector.extract_strided_slice %407 {offsets = [0, 16], sizes = [2, 8], strides = [1, 1]} : vector<2x24xf32> to vector<2x8xf32>
    %411 = vector.extract_strided_slice %402 {offsets = [0, 24], sizes = [2, 8], strides = [1, 1]} : vector<2x32xf32> to vector<2x8xf32>
    %412 = arith.mulf %409, %363 : vector<2x8xf32>
    %413 = arith.mulf %408, %411 : vector<2x8xf32>
    %414 = arith.addf %412, %413 : vector<2x8xf32>
    %415 = math.tanh %414 : vector<2x8xf32>
    %416 = arith.mulf %410, %415 : vector<2x8xf32>
    %c6_49 = arith.constant 6 : index
    %c0_50 = arith.constant 0 : index
    %c0_51 = arith.constant 0 : index
    %417 = vector.load %arg13[%c6_49, %c0_50, %c0_51] : memref<8x2x8xf32, #tpu.memory_space<vmem>>, vector<1x2x8xf32>
    %418 = vector.shape_cast %417 : vector<1x2x8xf32> to vector<2x8xf32>
    %419 = vector.shape_cast %416 : vector<2x8xf32> to vector<1x2x8xf32>
    tpu.vector_store %arg13[%c6_49, %c0_50, %c0_51], %419 {strides = array<i32>} : memref<8x2x8xf32, #tpu.memory_space<vmem>>, vector<1x2x8xf32>,
    %c14 = arith.constant 14 : index
    %c0_52 = arith.constant 0 : index
    %420 = vector.load %arg12[%c14, %c0_52] : memref<16x32xf32, #tpu.memory_space<vmem>>, vector<2x32xf32>
    %421 = vector.extract_strided_slice %416 {offsets = [0, 0], sizes = [2, 1], strides = [1, 1]} : vector<2x8xf32> to vector<2x1xf32>
    %422 = vector.broadcast %421 : vector<2x1xf32> to vector<2x32xf32>
    %423 = arith.mulf %422, %39 : vector<2x32xf32>
    %424 = vector.extract_strided_slice %416 {offsets = [0, 1], sizes = [2, 1], strides = [1, 1]} : vector<2x8xf32> to vector<2x1xf32>
    %425 = vector.broadcast %424 : vector<2x1xf32> to vector<2x32xf32>
    %426 = arith.mulf %425, %42 : vector<2x32xf32>
    %427 = vector.extract_strided_slice %416 {offsets = [0, 2], sizes = [2, 1], strides = [1, 1]} : vector<2x8xf32> to vector<2x1xf32>
    %428 = vector.broadcast %427 : vector<2x1xf32> to vector<2x32xf32>
    %429 = arith.mulf %428, %45 : vector<2x32xf32>
    %430 = vector.extract_strided_slice %416 {offsets = [0, 3], sizes = [2, 1], strides = [1, 1]} : vector<2x8xf32> to vector<2x1xf32>
    %431 = vector.broadcast %430 : vector<2x1xf32> to vector<2x32xf32>
    %432 = arith.mulf %431, %48 : vector<2x32xf32>
    %433 = vector.extract_strided_slice %416 {offsets = [0, 4], sizes = [2, 1], strides = [1, 1]} : vector<2x8xf32> to vector<2x1xf32>
    %434 = vector.broadcast %433 : vector<2x1xf32> to vector<2x32xf32>
    %435 = arith.mulf %434, %51 : vector<2x32xf32>
    %436 = vector.extract_strided_slice %416 {offsets = [0, 5], sizes = [2, 1], strides = [1, 1]} : vector<2x8xf32> to vector<2x1xf32>
    %437 = vector.broadcast %436 : vector<2x1xf32> to vector<2x32xf32>
    %438 = arith.mulf %437, %54 : vector<2x32xf32>
    %439 = vector.extract_strided_slice %416 {offsets = [0, 6], sizes = [2, 1], strides = [1, 1]} : vector<2x8xf32> to vector<2x1xf32>
    %440 = vector.broadcast %439 : vector<2x1xf32> to vector<2x32xf32>
    %441 = arith.mulf %440, %57 : vector<2x32xf32>
    %442 = vector.extract_strided_slice %416 {offsets = [0, 7], sizes = [2, 1], strides = [1, 1]} : vector<2x8xf32> to vector<2x1xf32>
    %443 = vector.broadcast %442 : vector<2x1xf32> to vector<2x32xf32>
    %444 = arith.mulf %443, %60 : vector<2x32xf32>
    %445 = arith.addf %423, %426 : vector<2x32xf32>
    %446 = arith.addf %429, %432 : vector<2x32xf32>
    %447 = arith.addf %435, %438 : vector<2x32xf32>
    %448 = arith.addf %441, %444 : vector<2x32xf32>
    %449 = arith.addf %445, %446 : vector<2x32xf32>
    %450 = arith.addf %447, %448 : vector<2x32xf32>
    %451 = arith.addf %449, %450 : vector<2x32xf32>
    %452 = arith.addf %420, %451 : vector<2x32xf32>
    %453 = math.tanh %452 : vector<2x32xf32>
    %454 = vector.extract_strided_slice %453 {offsets = [0, 0], sizes = [2, 24], strides = [1, 1]} : vector<2x32xf32> to vector<2x24xf32>
    %cst_53 = arith.constant 5.000000e-01 : f32
    %455 = vector.broadcast %cst_53 : f32 to vector<2x24xf32>
    %456 = arith.mulf %455, %454 : vector<2x24xf32>
    %cst_54 = arith.constant 5.000000e-01 : f32
    %457 = vector.broadcast %cst_54 : f32 to vector<2x24xf32>
    %458 = arith.addf %456, %457 : vector<2x24xf32>
    %459 = vector.extract_strided_slice %458 {offsets = [0, 0], sizes = [2, 8], strides = [1, 1]} : vector<2x24xf32> to vector<2x8xf32>
    %460 = vector.extract_strided_slice %458 {offsets = [0, 8], sizes = [2, 8], strides = [1, 1]} : vector<2x24xf32> to vector<2x8xf32>
    %461 = vector.extract_strided_slice %458 {offsets = [0, 16], sizes = [2, 8], strides = [1, 1]} : vector<2x24xf32> to vector<2x8xf32>
    %462 = vector.extract_strided_slice %453 {offsets = [0, 24], sizes = [2, 8], strides = [1, 1]} : vector<2x32xf32> to vector<2x8xf32>
    %463 = arith.mulf %460, %414 : vector<2x8xf32>
    %464 = arith.mulf %459, %462 : vector<2x8xf32>
    %465 = arith.addf %463, %464 : vector<2x8xf32>
    %466 = math.tanh %465 : vector<2x8xf32>
    %467 = arith.mulf %461, %466 : vector<2x8xf32>
    %c7 = arith.constant 7 : index
    %c0_55 = arith.constant 0 : index
    %c0_56 = arith.constant 0 : index
    %468 = vector.load %arg13[%c7, %c0_55, %c0_56] : memref<8x2x8xf32, #tpu.memory_space<vmem>>, vector<1x2x8xf32>
    %469 = vector.shape_cast %468 : vector<1x2x8xf32> to vector<2x8xf32>
    %470 = vector.shape_cast %467 : vector<2x8xf32> to vector<1x2x8xf32>
    tpu.vector_store %arg13[%c7, %c0_55, %c0_56], %470 {strides = array<i32>} : memref<8x2x8xf32, #tpu.memory_space<vmem>>, vector<1x2x8xf32>,
    %c0_57 = arith.constant 0 : index
    %c0_58 = arith.constant 0 : index
    %471 = vector.load %arg10[%c0_57, %c0_58] : memref<2x8xf32, #tpu.memory_space<vmem>>, vector<2x8xf32>
    tpu.vector_store %arg10[%c0_57, %c0_58], %467 {strides = array<i32>} : memref<2x8xf32, #tpu.memory_space<vmem>>, vector<2x8xf32>,
    %c0_59 = arith.constant 0 : index
    %c0_60 = arith.constant 0 : index
    %472 = vector.load %arg11[%c0_59, %c0_60] : memref<2x8xf32, #tpu.memory_space<vmem>>, vector<2x8xf32>
    tpu.vector_store %arg11[%c0_59, %c0_60], %465 {strides = array<i32>} : memref<2x8xf32, #tpu.memory_space<vmem>>, vector<2x8xf32>,
    %c0_61 = arith.constant 0 : index
    %c0_62 = arith.constant 0 : index
    %c0_63 = arith.constant 0 : index
    %473 = vector.load %arg13[%c0_61, %c0_62, %c0_63] : memref<8x2x8xf32, #tpu.memory_space<vmem>>, vector<8x2x8xf32>
    %c0_64 = arith.constant 0 : index
    %c0_65 = arith.constant 0 : index
    %474 = vector.load %arg5[%c0_64, %c0_65] : memref<1x8xf32, #tpu.memory_space<vmem>>, vector<1x8xf32>
    %475 = vector.shape_cast %474 : vector<1x8xf32> to vector<1x1x8xf32>
    %476 = vector.broadcast %475 : vector<1x1x8xf32> to vector<8x2x8xf32>
    %477 = arith.mulf %473, %476 : vector<8x2x8xf32>
    %cst_66 = arith.constant dense<0.000000e+00> : vector<8x2xf32>
    %478 = vector.multi_reduction <add>, %477, %cst_66 [2] : vector<8x2x8xf32> to vector<8x2xf32>
    %479 = vector.shape_cast %478 : vector<8x2xf32> to vector<8x2x1xf32>
    %c0_67 = arith.constant 0 : index
    %c0_68 = arith.constant 0 : index
    %480 = vector.load %arg6[%c0_67, %c0_68] : memref<1x1xf32, #tpu.memory_space<vmem>>, vector<1x1xf32>
    %481 = vector.shape_cast %480 : vector<1x1xf32> to vector<1x1x1xf32>
    %482 = vector.broadcast %481 : vector<1x1x1xf32> to vector<8x2x1xf32>
    %483 = arith.addf %479, %482 : vector<8x2x1xf32>
    %484 = math.exp %483 : vector<8x2x1xf32>
    %c0_69 = arith.constant 0 : index
    %c0_70 = arith.constant 0 : index
    %c0_71 = arith.constant 0 : index
    %485 = vector.load %arg9[%c0_69, %c0_70, %c0_71] : memref<8x2x1xf32, #tpu.memory_space<vmem>>, vector<8x2x1xf32>
    tpu.vector_store %arg9[%c0_69, %c0_70, %c0_71], %484 {strides = array<i32>} : memref<8x2x1xf32, #tpu.memory_space<vmem>>, vector<8x2x1xf32>,
    return
  }
  func.func @transform_0(%arg0: i32) -> (i32, i32) {
    %c0_i32 = arith.constant 0 : i32
    %c0_i32_0 = arith.constant 0 : i32
    %c0_i32_1 = arith.constant 0 : i32
    return %c0_i32, %c0_i32_0 : i32, i32
  }
  func.func @transform_1(%arg0: i32) -> (i32, i32) {
    %c0_i32 = arith.constant 0 : i32
    %c0_i32_0 = arith.constant 0 : i32
    %c0_i32_1 = arith.constant 0 : i32
    return %c0_i32, %c0_i32_0 : i32, i32
  }
  func.func @transform_2(%arg0: i32) -> (i32, i32) {
    %c0_i32 = arith.constant 0 : i32
    %c0_i32_0 = arith.constant 0 : i32
    %c0_i32_1 = arith.constant 0 : i32
    return %c0_i32, %c0_i32_0 : i32, i32
  }
  func.func @transform_3(%arg0: i32) -> (i32, i32) {
    %c0_i32 = arith.constant 0 : i32
    %c0_i32_0 = arith.constant 0 : i32
    %c0_i32_1 = arith.constant 0 : i32
    return %c0_i32, %c0_i32_0 : i32, i32
  }
  func.func @transform_4(%arg0: i32) -> (i32, i32) {
    %c0_i32 = arith.constant 0 : i32
    %c0_i32_0 = arith.constant 0 : i32
    %c0_i32_1 = arith.constant 0 : i32
    return %c0_i32, %c0_i32_0 : i32, i32
  }
  func.func @transform_5(%arg0: i32) -> (i32, i32) {
    %c0_i32 = arith.constant 0 : i32
    %c0_i32_0 = arith.constant 0 : i32
    %c0_i32_1 = arith.constant 0 : i32
    return %c0_i32, %c0_i32_0 : i32, i32
  }
  func.func @transform_6(%arg0: i32) -> (i32, i32) {
    %c0_i32 = arith.constant 0 : i32
    %c0_i32_0 = arith.constant 0 : i32
    %c0_i32_1 = arith.constant 0 : i32
    return %c0_i32, %c0_i32_0 : i32, i32
  }
  func.func @transform_7(%arg0: i32) -> (i32, i32) {
    %c0_i32 = arith.constant 0 : i32
    %c0_i32_0 = arith.constant 0 : i32
    %c0_i32_1 = arith.constant 0 : i32
    return %c0_i32, %c0_i32_0 : i32, i32
  }
  func.func @transform_8(%arg0: i32) -> (i32, i32, i32) {
    %c0_i32 = arith.constant 0 : i32
    %c0_i32_0 = arith.constant 0 : i32
    %c0_i32_1 = arith.constant 0 : i32
    %c0_i32_2 = arith.constant 0 : i32
    return %c0_i32, %c0_i32_0, %c0_i32_1 : i32, i32, i32
  }
  func.func @transform_9(%arg0: i32) -> (i32, i32) {
    %c0_i32 = arith.constant 0 : i32
    %c0_i32_0 = arith.constant 0 : i32
    %c0_i32_1 = arith.constant 0 : i32
    return %c0_i32, %c0_i32_0 : i32, i32
  }
  func.func @transform_10(%arg0: i32) -> (i32, i32) {
    %c0_i32 = arith.constant 0 : i32
    %c0_i32_0 = arith.constant 0 : i32
    %c0_i32_1 = arith.constant 0 : i32
    return %c0_i32, %c0_i32_0 : i32, i32
  }
}

</mosaic_0001>

<llo_original>
// kernel: rnn_forward.1
$region0: #{rnn_forward.1}
  #allocation0 [shape = 'u32[]', space=smem, size = 0x4, offset = 0x4, fixed_abs, tag = 'smem constant byte address 0x4 - core index']
  #allocation1 [shape = 'u32[144,128]{1,0:T(1,128)}', space=vmem, size = 0x12000, scoped, tag = 'internal scratch']
  #allocation2 [shape = 'f32[16,32]{1,0:T(8,128)}', space=vmem, size = 0x2000, scoped, tag = 'scratch operand']
  #allocation3 [shape = 'f32[8,2,8]{2,1,0:T(2,128)}', space=vmem, size = 0x2000, scoped, tag = 'scratch operand']
  #allocation4 [shape = 'f32[1,1]{1,0:T(1,128)S(1)}', space=vmem, size = 0x200, scoped, tag = 'scoped memory for rnn_forward.1']
  %s0 = inlined_call_operand.vmem [shape: f32[16,5], index: 0, kind: input, shape index: {}]
  %s1 = inlined_call_operand.vmem [shape: f32[5,32], index: 1, kind: input, shape index: {}]
  %s2 = inlined_call_operand.vmem [shape: f32[8,32], index: 2, kind: input, shape index: {}]
  %s3 = inlined_call_operand.vmem [shape: f32[1,32], index: 3, kind: input, shape index: {}]
  %s4 = inlined_call_operand.vmem [shape: f32[1,8], index: 4, kind: input, shape index: {}]
  %s5 = inlined_call_operand.<no memory space> [shape: f32[1,1], index: 5, kind: input, shape index: {}]
  %s6 = inlined_call_operand.vmem [shape: f32[2,8], index: 6, kind: input, shape index: {}, may-alias: {6,7}]
  %s7 = inlined_call_operand.vmem [shape: f32[2,8], index: 7, kind: input, shape index: {}, may-alias: {6,7}]
  %s8 = inlined_call_operand.vmem [shape: f32[8,2,1], index: 8, kind: output, shape index: {0}]
  %s9 = inlined_call_operand.hbm [shape: f32[2,8], index: 9, kind: output, shape index: {1}]
  %s10 = inlined_call_operand.hbm [shape: f32[2,8], index: 10, kind: output, shape index: {2}]
  %11 = xla_tuple %s8, %s9, %s10
  %s12 = sld [smem:[#allocation0]]
  $region58: #{rnn_forward.1} parent=0
    _
  %s14 = ssub.s32 1, %s12
  %s15 = scalar_select 0, %s14, %s12
  %v16 = vstv %s5
  %17 = vst [vmem:[#allocation4] sm:$0x1] %v16
  $region1: #{rnn_forward.1} parent=0
    #allocation5 [shape = 'u8[1024]{0}', space=vmem, size = 0x400, scoped, tag = 'output window, operand 1, single buffered']
    #allocation6 [shape = 's32[1]{0}', space=sflag, size = 0x4, scoped, tag = 'scoped memory for rnn_forward.1']
    #allocation7 [shape = 'u8[1024]{0}', space=vmem, size = 0x400, scoped, tag = 'output window, operand 2, single buffered']
    #allocation8 [shape = 's32[1]{0}', space=sflag, size = 0x4, scoped, tag = 'scoped memory for rnn_forward.1']
    %18 = vsyncpa [#allocation6], 0
    %19 = vsyncpa [#allocation8], 0
    // Predicated region
    $region2: #{rnn_forward.1} parent=1 // pred_check
      _
    $region3: #{rnn_forward.1} parent=1 // pred_check_branch
      %21 = sbr.rel (0) target = $region5
    $region4: #{rnn_forward.1} parent=1 // pred_region
      _
    $region5: #{rnn_forward.1} parent=1 // pred_fallthru
      _
    // Predicated region
    $region6: #{rnn_forward.1} parent=1 // pred_check
      _
    $region7: #{rnn_forward.1} parent=1 // pred_check_branch
      %23 = sbr.rel (0) target = $region9
    $region8: #{rnn_forward.1} parent=1 // pred_region
      _
    $region9: #{rnn_forward.1} parent=1 // pred_fallthru
      _
    // Predicated region
    $region10: #{rnn_forward.1} parent=1 // pred_check
      _
    $region11: #{rnn_forward.1} parent=1 // pred_check_branch
      %25 = sbr.rel (0) target = $region13
    $region12: #{rnn_forward.1} parent=1 // pred_region
      _
    $region13: #{rnn_forward.1} parent=1 // pred_fallthru
      _
    // Predicated region
    $region14: #{rnn_forward.1} parent=1 // pred_check
      _
    $region15: #{rnn_forward.1} parent=1 // pred_check_branch
      %27 = sbr.rel (0) target = $region17
    $region16: #{rnn_forward.1} parent=1 // pred_region
      _
    $region17: #{rnn_forward.1} parent=1 // pred_fallthru
      _
    // Predicated region
    $region18: #{rnn_forward.1} parent=1 // pred_check
      _
    $region19: #{rnn_forward.1} parent=1 // pred_check_branch
      %29 = sbr.rel (0) target = $region21
    $region20: #{rnn_forward.1} parent=1 // pred_region
      _
    $region21: #{rnn_forward.1} parent=1 // pred_fallthru
      _
    // Predicated region
    $region22: #{rnn_forward.1} parent=1 // pred_check
      _
    $region23: #{rnn_forward.1} parent=1 // pred_check_branch
      %31 = sbr.rel (0) target = $region25
    $region24: #{rnn_forward.1} parent=1 // pred_region
      _
    $region25: #{rnn_forward.1} parent=1 // pred_fallthru
      _
    // Predicated region
    $region26: #{rnn_forward.1} parent=1 // pred_check
      _
    $region27: #{rnn_forward.1} parent=1 // pred_check_branch
      %33 = sbr.rel (0) target = $region29
    $region28: #{rnn_forward.1} parent=1 // pred_region
      _
    $region29: #{rnn_forward.1} parent=1 // pred_fallthru
      _
    // Predicated region
    $region30: #{rnn_forward.1} parent=1 // pred_check
      _
    $region31: #{rnn_forward.1} parent=1 // pred_check_branch
      %35 = sbr.rel (0) target = $region33
    $region32: #{rnn_forward.1} parent=1 // pred_region
      _
    $region33: #{rnn_forward.1} parent=1 // pred_fallthru
      _
    %v36 = vld [vmem:[%s0] sm:$0xff]
    %v37 = vld [vmem:[%s0 + $0x8] sm:$0xff]
    %v38 = vld [vmem:[%s1] sm:$0x1f]
    %v39 = vld [vmem:[%s3] sm:$0x1]
    %v41 = vlaneseq
    %v42 = vshrl.u32 %v41, 7
    %v43 = vsub.s32 0, %v42
    %v44 = vrot.slane %v39, %v43
    %47 = vset.pattern.permute.xlu0 0
    %48 = vperm.xlu0 %47, %v36
    %v49 = vpop.permute.xlu0 %48
    %52 = vset.pattern.permute.xlu0 0
    %53 = vperm.xlu0 %52, %v37
    %v54 = vpop.permute.xlu0 %53
    %v56 = vlaneseq
    %v57 = vshrl.u32 %v56, 7
    %v58 = vsub.s32 0, %v57
    %v59 = vrot.slane %v38, %v58
    %v60 = vmul.f32 %v49, %v59
    %v61 = vmul.f32 %v54, %v59
    %62 = vset.pattern.permute.xlu0 1
    %63 = vperm.xlu0 %62, %v36
    %v64 = vpop.permute.xlu0 %63
    %66 = vset.pattern.permute.xlu0 1
    %67 = vperm.xlu0 %66, %v37
    %v68 = vpop.permute.xlu0 %67
    %v70 = vlaneseq
    %v71 = vshrl.u32 %v70, 7
    %v72 = vsub.s32 1, %v71
    %v73 = vrot.slane %v38, %v72
    %v74 = vmul.f32 %v64, %v73
    %v75 = vmul.f32 %v68, %v73
    %76 = vset.pattern.permute.xlu0 2
    %77 = vperm.xlu0 %76, %v36
    %v78 = vpop.permute.xlu0 %77
    %80 = vset.pattern.permute.xlu0 2
    %81 = vperm.xlu0 %80, %v37
    %v82 = vpop.permute.xlu0 %81
    %v84 = vlaneseq
    %v85 = vshrl.u32 %v84, 7
    %v86 = vsub.s32 2, %v85
    %v87 = vrot.slane %v38, %v86
    %v88 = vmul.f32 %v78, %v87
    %v89 = vmul.f32 %v82, %v87
    %90 = vset.pattern.permute.xlu0 3
    %91 = vperm.xlu0 %90, %v36
    %v92 = vpop.permute.xlu0 %91
    %94 = vset.pattern.permute.xlu0 3
    %95 = vperm.xlu0 %94, %v37
    %v96 = vpop.permute.xlu0 %95
    %v98 = vlaneseq
    %v99 = vshrl.u32 %v98, 7
    %v100 = vsub.s32 3, %v99
    %v101 = vrot.slane %v38, %v100
    %v102 = vmul.f32 %v92, %v101
    %v103 = vmul.f32 %v96, %v101
    %104 = vset.pattern.permute.xlu0 4
    %105 = vperm.xlu0 %104, %v36
    %v106 = vpop.permute.xlu0 %105
    %108 = vset.pattern.permute.xlu0 4
    %109 = vperm.xlu0 %108, %v37
    %v110 = vpop.permute.xlu0 %109
    %v112 = vlaneseq
    %v113 = vshrl.u32 %v112, 7
    %v114 = vsub.s32 4, %v113
    %v115 = vrot.slane %v38, %v114
    %v116 = vmul.f32 %v106, %v115
    %v117 = vmul.f32 %v110, %v115
    %v118 = vadd.f32 %v60, %v74
    %v119 = vadd.f32 %v61, %v75
    %v120 = vadd.f32 %v88, %v102
    %v121 = vadd.f32 %v89, %v103
    %v122 = vadd.f32 %v118, %v120
    %v123 = vadd.f32 %v119, %v121
    %v124 = vadd.f32 %v122, %v116
    %v125 = vadd.f32 %v123, %v117
    %v126 = vadd.f32 %v44, %v124
    %v127 = vadd.f32 %v44, %v125
    %vm128 = vcmask 261120
    %129 = vst.msk [vmem:[#allocation2] sm:$0xff] %vm128, %v126
    %130 = vst.msk [vmem:[#allocation2 + $0x8] sm:$0xff] %vm128, %v127
    %v131 = vld [vmem:[%s2] sm:$0xff]
    %v132 = vlaneseq
    %v133 = vshrl.u32 %v132, 7
    %v134 = vsub.s32 0, %v133
    %v135 = vrot.slane %v131, %v134
    %v136 = vlaneseq
    %v137 = vshrl.u32 %v136, 7
    %v138 = vsub.s32 1, %v137
    %v139 = vrot.slane %v131, %v138
    %v140 = vlaneseq
    %v141 = vshrl.u32 %v140, 7
    %v142 = vsub.s32 2, %v141
    %v143 = vrot.slane %v131, %v142
    %v144 = vlaneseq
    %v145 = vshrl.u32 %v144, 7
    %v146 = vsub.s32 3, %v145
    %v147 = vrot.slane %v131, %v146
    %v148 = vlaneseq
    %v149 = vshrl.u32 %v148, 7
    %v150 = vsub.s32 4, %v149
    %v151 = vrot.slane %v131, %v150
    %v152 = vlaneseq
    %v153 = vshrl.u32 %v152, 7
    %v154 = vsub.s32 5, %v153
    %v155 = vrot.slane %v131, %v154
    %v156 = vlaneseq
    %v157 = vshrl.u32 %v156, 7
    %v158 = vsub.s32 6, %v157
    %v159 = vrot.slane %v131, %v158
    %v160 = vlaneseq
    %v161 = vshrl.u32 %v160, 7
    %v162 = vsub.s32 7, %v161
    %v163 = vrot.slane %v131, %v162
    %v164 = vld [vmem:[%s6] sm:$0x3]
    %v165 = vld [vmem:[%s7] sm:$0x3]
    %v166 = vld [vmem:[#allocation2] sm:$0x3]
    %168 = vset.pattern.permute.xlu0 0
    %169 = vperm.xlu0 %168, %v164
    %v170 = vpop.permute.xlu0 %169
    %v172 = vmul.f32 %v170, %v135
    %173 = vset.pattern.permute.xlu0 1
    %174 = vperm.xlu0 %173, %v164
    %v175 = vpop.permute.xlu0 %174
    %v177 = vmul.f32 %v175, %v139
    %178 = vset.pattern.permute.xlu0 2
    %179 = vperm.xlu0 %178, %v164
    %v180 = vpop.permute.xlu0 %179
    %v182 = vmul.f32 %v180, %v143
    %183 = vset.pattern.permute.xlu0 3
    %184 = vperm.xlu0 %183, %v164
    %v185 = vpop.permute.xlu0 %184
    %v187 = vmul.f32 %v185, %v147
    %188 = vset.pattern.permute.xlu0 4
    %189 = vperm.xlu0 %188, %v164
    %v190 = vpop.permute.xlu0 %189
    %v192 = vmul.f32 %v190, %v151
    %193 = vset.pattern.permute.xlu0 5
    %194 = vperm.xlu0 %193, %v164
    %v195 = vpop.permute.xlu0 %194
    %v197 = vmul.f32 %v195, %v155
    %198 = vset.pattern.permute.xlu0 6
    %199 = vperm.xlu0 %198, %v164
    %v200 = vpop.permute.xlu0 %199
    %v202 = vmul.f32 %v200, %v159
    %203 = vset.pattern.permute.xlu0 7
    %204 = vperm.xlu0 %203, %v164
    %v205 = vpop.permute.xlu0 %204
    %v207 = vmul.f32 %v205, %v163
    %v208 = vadd.f32 %v172, %v177
    %v209 = vadd.f32 %v182, %v187
    %v210 = vadd.f32 %v192, %v197
    %v211 = vadd.f32 %v202, %v207
    %v212 = vadd.f32 %v208, %v209
    %v213 = vadd.f32 %v210, %v211
    %v214 = vadd.f32 %v212, %v213
    %v215 = vadd.f32 %v166, %v214
    %v216 = vtanh.pop %v215
    %v217 = vmul.f32 %v216, 0.5
    %v218 = vadd.f32 %v217, 0.5
    %220 = vrot.lane.b32.xlu0 %v165, 8
    %v221 = vpop.permute.xlu0 %220
    %v223 = vmul.f32 %v218, %v221
    %225 = vrot.lane.b32.xlu0 %v216, 104
    %v226 = vpop.permute.xlu0 %225
    %v228 = vmul.f32 %v218, %v226
    %230 = vrot.lane.b32.xlu0 %v228, 8
    %v231 = vpop.permute.xlu0 %230
    %v233 = vadd.f32 %v223, %v231
    %v234 = vtanh.pop %v233
    %236 = vrot.lane.b32.xlu0 %v234, 8
    %v237 = vpop.permute.xlu0 %236
    %v239 = vmul.f32 %v218, %v237
    %241 = vrot.lane.b32.xlu0 %v239, 112
    %v242 = vpop.permute.xlu0 %241
    %vm244 = vcmask 58368
    %245 = vst.msk [vmem:[#allocation3] sm:$0x3] %vm244, %v242
    %v246 = vld [vmem:[#allocation2 + $0x2] sm:$0x3]
    %247 = vset.pattern.permute.xlu0 16
    %248 = vperm.xlu0 %247, %v239
    %v249 = vpop.permute.xlu0 %248
    %v251 = vmul.f32 %v249, %v135
    %252 = vset.pattern.permute.xlu0 17
    %253 = vperm.xlu0 %252, %v239
    %v254 = vpop.permute.xlu0 %253
    %v256 = vmul.f32 %v254, %v139
    %257 = vset.pattern.permute.xlu0 18
    %258 = vperm.xlu0 %257, %v239
    %v259 = vpop.permute.xlu0 %258
    %v261 = vmul.f32 %v259, %v143
    %262 = vset.pattern.permute.xlu0 19
    %263 = vperm.xlu0 %262, %v239
    %v264 = vpop.permute.xlu0 %263
    %v266 = vmul.f32 %v264, %v147
    %267 = vset.pattern.permute.xlu0 20
    %268 = vperm.xlu0 %267, %v239
    %v269 = vpop.permute.xlu0 %268
    %v271 = vmul.f32 %v269, %v151
    %272 = vset.pattern.permute.xlu0 21
    %273 = vperm.xlu0 %272, %v239
    %v274 = vpop.permute.xlu0 %273
    %v276 = vmul.f32 %v274, %v155
    %277 = vset.pattern.permute.xlu0 22
    %278 = vperm.xlu0 %277, %v239
    %v279 = vpop.permute.xlu0 %278
    %v281 = vmul.f32 %v279, %v159
    %282 = vset.pattern.permute.xlu0 23
    %283 = vperm.xlu0 %282, %v239
    %v284 = vpop.permute.xlu0 %283
    %v286 = vmul.f32 %v284, %v163
    %v287 = vadd.f32 %v251, %v256
    %v288 = vadd.f32 %v261, %v266
    %v289 = vadd.f32 %v271, %v276
    %v290 = vadd.f32 %v281, %v286
    %v291 = vadd.f32 %v287, %v288
    %v292 = vadd.f32 %v289, %v290
    %v293 = vadd.f32 %v291, %v292
    %v294 = vadd.f32 %v246, %v293
    %v295 = vtanh.pop %v294
    %v296 = vmul.f32 %v295, 0.5
    %v297 = vadd.f32 %v296, 0.5
    %v298 = vmul.f32 %v297, %v233
    %300 = vrot.lane.b32.xlu0 %v295, 104
    %v301 = vpop.permute.xlu0 %300
    %v303 = vmul.f32 %v297, %v301
    %305 = vrot.lane.b32.xlu0 %v303, 8
    %v306 = vpop.permute.xlu0 %305
    %v308 = vadd.f32 %v298, %v306
    %v309 = vtanh.pop %v308
    %311 = vrot.lane.b32.xlu0 %v309, 8
    %v312 = vpop.permute.xlu0 %311
    %v314 = vmul.f32 %v297, %v312
    %316 = vrot.lane.b32.xlu0 %v314, 112
    %v317 = vpop.permute.xlu0 %316
    %s319 = scalar_lea.vmem [#allocation3], 2
    %320 = vst.msk [vmem:[%s319] sm:$0x3] %vm244, %v317
    %v321 = vld [vmem:[#allocation2 + $0x4] sm:$0x3]
    %322 = vset.pattern.permute.xlu0 16
    %323 = vperm.xlu0 %322, %v314
    %v324 = vpop.permute.xlu0 %323
    %v326 = vmul.f32 %v324, %v135
    %327 = vset.pattern.permute.xlu0 17
    %328 = vperm.xlu0 %327, %v314
    %v329 = vpop.permute.xlu0 %328
    %v331 = vmul.f32 %v329, %v139
    %332 = vset.pattern.permute.xlu0 18
    %333 = vperm.xlu0 %332, %v314
    %v334 = vpop.permute.xlu0 %333
    %v336 = vmul.f32 %v334, %v143
    %337 = vset.pattern.permute.xlu0 19
    %338 = vperm.xlu0 %337, %v314
    %v339 = vpop.permute.xlu0 %338
    %v341 = vmul.f32 %v339, %v147
    %342 = vset.pattern.permute.xlu0 20
    %343 = vperm.xlu0 %342, %v314
    %v344 = vpop.permute.xlu0 %343
    %v346 = vmul.f32 %v344, %v151
    %347 = vset.pattern.permute.xlu0 21
    %348 = vperm.xlu0 %347, %v314
    %v349 = vpop.permute.xlu0 %348
    %v351 = vmul.f32 %v349, %v155
    %352 = vset.pattern.permute.xlu0 22
    %353 = vperm.xlu0 %352, %v314
    %v354 = vpop.permute.xlu0 %353
    %v356 = vmul.f32 %v354, %v159
    %357 = vset.pattern.permute.xlu0 23
    %358 = vperm.xlu0 %357, %v314
    %v359 = vpop.permute.xlu0 %358
    %v361 = vmul.f32 %v359, %v163
    %v362 = vadd.f32 %v326, %v331
    %v363 = vadd.f32 %v336, %v341
    %v364 = vadd.f32 %v346, %v351
    %v365 = vadd.f32 %v356, %v361
    %v366 = vadd.f32 %v362, %v363
    %v367 = vadd.f32 %v364, %v365
    %v368 = vadd.f32 %v366, %v367
    %v369 = vadd.f32 %v321, %v368
    %v370 = vtanh.pop %v369
    %v371 = vmul.f32 %v370, 0.5
    %v372 = vadd.f32 %v371, 0.5
    %v373 = vmul.f32 %v372, %v308
    %375 = vrot.lane.b32.xlu0 %v370, 104
    %v376 = vpop.permute.xlu0 %375
    %v378 = vmul.f32 %v372, %v376
    %380 = vrot.lane.b32.xlu0 %v378, 8
    %v381 = vpop.permute.xlu0 %380
    %v383 = vadd.f32 %v373, %v381
    %v384 = vtanh.pop %v383
    %386 = vrot.lane.b32.xlu0 %v384, 8
    %v387 = vpop.permute.xlu0 %386
    %v389 = vmul.f32 %v372, %v387
    %391 = vrot.lane.b32.xlu0 %v389, 112
    %v392 = vpop.permute.xlu0 %391
    %s394 = scalar_lea.vmem [#allocation3], 4
    %395 = vst.msk [vmem:[%s394] sm:$0x3] %vm244, %v392
    %v396 = vld [vmem:[#allocation2 + $0x6] sm:$0x3]
    %397 = vset.pattern.permute.xlu0 16
    %398 = vperm.xlu0 %397, %v389
    %v399 = vpop.permute.xlu0 %398
    %v401 = vmul.f32 %v399, %v135
    %402 = vset.pattern.permute.xlu0 17
    %403 = vperm.xlu0 %402, %v389
    %v404 = vpop.permute.xlu0 %403
    %v406 = vmul.f32 %v404, %v139
    %407 = vset.pattern.permute.xlu0 18
    %408 = vperm.xlu0 %407, %v389
    %v409 = vpop.permute.xlu0 %408
    %v411 = vmul.f32 %v409, %v143
    %412 = vset.pattern.permute.xlu0 19
    %413 = vperm.xlu0 %412, %v389
    %v414 = vpop.permute.xlu0 %413
    %v416 = vmul.f32 %v414, %v147
    %417 = vset.pattern.permute.xlu0 20
    %418 = vperm.xlu0 %417, %v389
    %v419 = vpop.permute.xlu0 %418
    %v421 = vmul.f32 %v419, %v151
    %422 = vset.pattern.permute.xlu0 21
    %423 = vperm.xlu0 %422, %v389
    %v424 = vpop.permute.xlu0 %423
    %v426 = vmul.f32 %v424, %v155
    %427 = vset.pattern.permute.xlu0 22
    %428 = vperm.xlu0 %427, %v389
    %v429 = vpop.permute.xlu0 %428
    %v431 = vmul.f32 %v429, %v159
    %432 = vset.pattern.permute.xlu0 23
    %433 = vperm.xlu0 %432, %v389
    %v434 = vpop.permute.xlu0 %433
    %v436 = vmul.f32 %v434, %v163
    %v437 = vadd.f32 %v401, %v406
    %v438 = vadd.f32 %v411, %v416
    %v439 = vadd.f32 %v421, %v426
    %v440 = vadd.f32 %v431, %v436
    %v441 = vadd.f32 %v437, %v438
    %v442 = vadd.f32 %v439, %v440
    %v443 = vadd.f32 %v441, %v442
    %v444 = vadd.f32 %v396, %v443
    %v445 = vtanh.pop %v444
    %v446 = vmul.f32 %v445, 0.5
    %v447 = vadd.f32 %v446, 0.5
    %v448 = vmul.f32 %v447, %v383
    %450 = vrot.lane.b32.xlu0 %v445, 104
    %v451 = vpop.permute.xlu0 %450
    %v453 = vmul.f32 %v447, %v451
    %455 = vrot.lane.b32.xlu0 %v453, 8
    %v456 = vpop.permute.xlu0 %455
    %v458 = vadd.f32 %v448, %v456
    %v459 = vtanh.pop %v458
    %461 = vrot.lane.b32.xlu0 %v459, 8
    %v462 = vpop.permute.xlu0 %461
    %v464 = vmul.f32 %v447, %v462
    %466 = vrot.lane.b32.xlu0 %v464, 112
    %v467 = vpop.permute.xlu0 %466
    %s469 = scalar_lea.vmem [#allocation3], 6
    %470 = vst.msk [vmem:[%s469] sm:$0x3] %vm244, %v467
    %v471 = vld [vmem:[#allocation2 + $0x8] sm:$0x3]
    %472 = vset.pattern.permute.xlu0 16
    %473 = vperm.xlu0 %472, %v464
    %v474 = vpop.permute.xlu0 %473
    %v476 = vmul.f32 %v474, %v135
    %477 = vset.pattern.permute.xlu0 17
    %478 = vperm.xlu0 %477, %v464
    %v479 = vpop.permute.xlu0 %478
    %v481 = vmul.f32 %v479, %v139
    %482 = vset.pattern.permute.xlu0 18
    %483 = vperm.xlu0 %482, %v464
    %v484 = vpop.permute.xlu0 %483
    %v486 = vmul.f32 %v484, %v143
    %487 = vset.pattern.permute.xlu0 19
    %488 = vperm.xlu0 %487, %v464
    %v489 = vpop.permute.xlu0 %488
    %v491 = vmul.f32 %v489, %v147
    %492 = vset.pattern.permute.xlu0 20
    %493 = vperm.xlu0 %492, %v464
    %v494 = vpop.permute.xlu0 %493
    %v496 = vmul.f32 %v494, %v151
    %497 = vset.pattern.permute.xlu0 21
    %498 = vperm.xlu0 %497, %v464
    %v499 = vpop.permute.xlu0 %498
    %v501 = vmul.f32 %v499, %v155
    %502 = vset.pattern.permute.xlu0 22
    %503 = vperm.xlu0 %502, %v464
    %v504 = vpop.permute.xlu0 %503
    %v506 = vmul.f32 %v504, %v159
    %507 = vset.pattern.permute.xlu0 23
    %508 = vperm.xlu0 %507, %v464
    %v509 = vpop.permute.xlu0 %508
    %v511 = vmul.f32 %v509, %v163
    %v512 = vadd.f32 %v476, %v481
    %v513 = vadd.f32 %v486, %v491
    %v514 = vadd.f32 %v496, %v501
    %v515 = vadd.f32 %v506, %v511
    %v516 = vadd.f32 %v512, %v513
    %v517 = vadd.f32 %v514, %v515
    %v518 = vadd.f32 %v516, %v517
    %v519 = vadd.f32 %v471, %v518
    %v520 = vtanh.pop %v519
    %v521 = vmul.f32 %v520, 0.5
    %v522 = vadd.f32 %v521, 0.5
    %v523 = vmul.f32 %v522, %v458
    %525 = vrot.lane.b32.xlu0 %v520, 104
    %v526 = vpop.permute.xlu0 %525
    %v528 = vmul.f32 %v522, %v526
    %530 = vrot.lane.b32.xlu0 %v528, 8
    %v531 = vpop.permute.xlu0 %530
    %v533 = vadd.f32 %v523, %v531
    %v534 = vtanh.pop %v533
    %536 = vrot.lane.b32.xlu0 %v534, 8
    %v537 = vpop.permute.xlu0 %536
    %v539 = vmul.f32 %v522, %v537
    %541 = vrot.lane.b32.xlu0 %v539, 112
    %v542 = vpop.permute.xlu0 %541
    %s544 = scalar_lea.vmem [#allocation3], 8
    %545 = vst.msk [vmem:[%s544] sm:$0x3] %vm244, %v542
    %v546 = vld [vmem:[#allocation2 + $0xa] sm:$0x3]
    %547 = vset.pattern.permute.xlu0 16
    %548 = vperm.xlu0 %547, %v539
    %v549 = vpop.permute.xlu0 %548
    %v551 = vmul.f32 %v549, %v135
    %552 = vset.pattern.permute.xlu0 17
    %553 = vperm.xlu0 %552, %v539
    %v554 = vpop.permute.xlu0 %553
    %v556 = vmul.f32 %v554, %v139
    %557 = vset.pattern.permute.xlu0 18
    %558 = vperm.xlu0 %557, %v539
    %v559 = vpop.permute.xlu0 %558
    %v561 = vmul.f32 %v559, %v143
    %562 = vset.pattern.permute.xlu0 19
    %563 = vperm.xlu0 %562, %v539
    %v564 = vpop.permute.xlu0 %563
    %v566 = vmul.f32 %v564, %v147
    %567 = vset.pattern.permute.xlu0 20
    %568 = vperm.xlu0 %567, %v539
    %v569 = vpop.permute.xlu0 %568
    %v571 = vmul.f32 %v569, %v151
    %572 = vset.pattern.permute.xlu0 21
    %573 = vperm.xlu0 %572, %v539
    %v574 = vpop.permute.xlu0 %573
    %v576 = vmul.f32 %v574, %v155
    %577 = vset.pattern.permute.xlu0 22
    %578 = vperm.xlu0 %577, %v539
    %v579 = vpop.permute.xlu0 %578
    %v581 = vmul.f32 %v579, %v159
    %582 = vset.pattern.permute.xlu0 23
    %583 = vperm.xlu0 %582, %v539
    %v584 = vpop.permute.xlu0 %583
    %v586 = vmul.f32 %v584, %v163
    %v587 = vadd.f32 %v551, %v556
    %v588 = vadd.f32 %v561, %v566
    %v589 = vadd.f32 %v571, %v576
    %v590 = vadd.f32 %v581, %v586
    %v591 = vadd.f32 %v587, %v588
    %v592 = vadd.f32 %v589, %v590
    %v593 = vadd.f32 %v591, %v592
    %v594 = vadd.f32 %v546, %v593
    %v595 = vtanh.pop %v594
    %v596 = vmul.f32 %v595, 0.5
    %v597 = vadd.f32 %v596, 0.5
    %v598 = vmul.f32 %v597, %v533
    %600 = vrot.lane.b32.xlu0 %v595, 104
    %v601 = vpop.permute.xlu0 %600
    %v603 = vmul.f32 %v597, %v601
    %605 = vrot.lane.b32.xlu0 %v603, 8
    %v606 = vpop.permute.xlu0 %605
    %v608 = vadd.f32 %v598, %v606
    %v609 = vtanh.pop %v608
    %611 = vrot.lane.b32.xlu0 %v609, 8
    %v612 = vpop.permute.xlu0 %611
    %v614 = vmul.f32 %v597, %v612
    %616 = vrot.lane.b32.xlu0 %v614, 112
    %v617 = vpop.permute.xlu0 %616
    %s619 = scalar_lea.vmem [#allocation3], 10
    %620 = vst.msk [vmem:[%s619] sm:$0x3] %vm244, %v617
    %v621 = vld [vmem:[#allocation2 + $0xc] sm:$0x3]
    %622 = vset.pattern.permute.xlu0 16
    %623 = vperm.xlu0 %622, %v614
    %v624 = vpop.permute.xlu0 %623
    %v626 = vmul.f32 %v624, %v135
    %627 = vset.pattern.permute.xlu0 17
    %628 = vperm.xlu0 %627, %v614
    %v629 = vpop.permute.xlu0 %628
    %v631 = vmul.f32 %v629, %v139
    %632 = vset.pattern.permute.xlu0 18
    %633 = vperm.xlu0 %632, %v614
    %v634 = vpop.permute.xlu0 %633
    %v636 = vmul.f32 %v634, %v143
    %637 = vset.pattern.permute.xlu0 19
    %638 = vperm.xlu0 %637, %v614
    %v639 = vpop.permute.xlu0 %638
    %v641 = vmul.f32 %v639, %v147
    %642 = vset.pattern.permute.xlu0 20
    %643 = vperm.xlu0 %642, %v614
    %v644 = vpop.permute.xlu0 %643
    %v646 = vmul.f32 %v644, %v151
    %647 = vset.pattern.permute.xlu0 21
    %648 = vperm.xlu0 %647, %v614
    %v649 = vpop.permute.xlu0 %648
    %v651 = vmul.f32 %v649, %v155
    %652 = vset.pattern.permute.xlu0 22
    %653 = vperm.xlu0 %652, %v614
    %v654 = vpop.permute.xlu0 %653
    %v656 = vmul.f32 %v654, %v159
    %657 = vset.pattern.permute.xlu0 23
    %658 = vperm.xlu0 %657, %v614
    %v659 = vpop.permute.xlu0 %658
    %v661 = vmul.f32 %v659, %v163
    %v662 = vadd.f32 %v626, %v631
    %v663 = vadd.f32 %v636, %v641
    %v664 = vadd.f32 %v646, %v651
    %v665 = vadd.f32 %v656, %v661
    %v666 = vadd.f32 %v662, %v663
    %v667 = vadd.f32 %v664, %v665
    %v668 = vadd.f32 %v666, %v667
    %v669 = vadd.f32 %v621, %v668
    %v670 = vtanh.pop %v669
    %v671 = vmul.f32 %v670, 0.5
    %v672 = vadd.f32 %v671, 0.5
    %v673 = vmul.f32 %v672, %v608
    %675 = vrot.lane.b32.xlu0 %v670, 104
    %v676 = vpop.permute.xlu0 %675
    %v678 = vmul.f32 %v672, %v676
    %680 = vrot.lane.b32.xlu0 %v678, 8
    %v681 = vpop.permute.xlu0 %680
    %v683 = vadd.f32 %v673, %v681
    %v684 = vtanh.pop %v683
    %686 = vrot.lane.b32.xlu0 %v684, 8
    %v687 = vpop.permute.xlu0 %686
    %v689 = vmul.f32 %v672, %v687
    %691 = vrot.lane.b32.xlu0 %v689, 112
    %v692 = vpop.permute.xlu0 %691
    %s694 = scalar_lea.vmem [#allocation3], 12
    %695 = vst.msk [vmem:[%s694] sm:$0x3] %vm244, %v692
    %v696 = vld [vmem:[#allocation2 + $0xe] sm:$0x3]
    %697 = vset.pattern.permute.xlu0 16
    %698 = vperm.xlu0 %697, %v689
    %v699 = vpop.permute.xlu0 %698
    %v701 = vmul.f32 %v699, %v135
    %702 = vset.pattern.permute.xlu0 17
    %703 = vperm.xlu0 %702, %v689
    %v704 = vpop.permute.xlu0 %703
    %v706 = vmul.f32 %v704, %v139
    %707 = vset.pattern.permute.xlu0 18
    %708 = vperm.xlu0 %707, %v689
    %v709 = vpop.permute.xlu0 %708
    %v711 = vmul.f32 %v709, %v143
    %712 = vset.pattern.permute.xlu0 19
    %713 = vperm.xlu0 %712, %v689
    %v714 = vpop.permute.xlu0 %713
    %v716 = vmul.f32 %v714, %v147
    %717 = vset.pattern.permute.xlu0 20
    %718 = vperm.xlu0 %717, %v689
    %v719 = vpop.permute.xlu0 %718
    %v721 = vmul.f32 %v719, %v151
    %722 = vset.pattern.permute.xlu0 21
    %723 = vperm.xlu0 %722, %v689
    %v724 = vpop.permute.xlu0 %723
    %v726 = vmul.f32 %v724, %v155
    %727 = vset.pattern.permute.xlu0 22
    %728 = vperm.xlu0 %727, %v689
    %v729 = vpop.permute.xlu0 %728
    %v731 = vmul.f32 %v729, %v159
    %732 = vset.pattern.permute.xlu0 23
    %733 = vperm.xlu0 %732, %v689
    %v734 = vpop.permute.xlu0 %733
    %v736 = vmul.f32 %v734, %v163
    %v737 = vadd.f32 %v701, %v706
    %v738 = vadd.f32 %v711, %v716
    %v739 = vadd.f32 %v721, %v726
    %v740 = vadd.f32 %v731, %v736
    %v741 = vadd.f32 %v737, %v738
    %v742 = vadd.f32 %v739, %v740
    %v743 = vadd.f32 %v741, %v742
    %v744 = vadd.f32 %v696, %v743
    %v745 = vtanh.pop %v744
    %v746 = vmul.f32 %v745, 0.5
    %v747 = vadd.f32 %v746, 0.5
    %v748 = vmul.f32 %v747, %v683
    %750 = vrot.lane.b32.xlu0 %v745, 104
    %v751 = vpop.permute.xlu0 %750
    %v753 = vmul.f32 %v747, %v751
    %755 = vrot.lane.b32.xlu0 %v753, 8
    %v756 = vpop.permute.xlu0 %755
    %v758 = vadd.f32 %v748, %v756
    %v759 = vtanh.pop %v758
    %761 = vrot.lane.b32.xlu0 %v759, 8
    %v762 = vpop.permute.xlu0 %761
    %v764 = vmul.f32 %v747, %v762
    %766 = vrot.lane.b32.xlu0 %v764, 112
    %v767 = vpop.permute.xlu0 %766
    %s769 = scalar_lea.vmem [#allocation3], 14
    %770 = vst.msk [vmem:[%s769] sm:$0x3] %vm244, %v767
    %771 = vst.msk [vmem:[#allocation5] sm:$0x3] %vm244, %v767
    %773 = vrot.lane.b32.xlu0 %v758, 120
    %v774 = vpop.permute.xlu0 %773
    %776 = vst.msk [vmem:[#allocation7] sm:$0x3] %vm244, %v774
    %v777 = vld [vmem:[#allocation3] sm:$0x3]
    %v778 = vld [vmem:[#allocation3 + $0x2] sm:$0x3]
    %v779 = vld [vmem:[#allocation3 + $0x4] sm:$0x3]
    %v780 = vld [vmem:[#allocation3 + $0x6] sm:$0x3]
    %v781 = vld [vmem:[#allocation3 + $0x8] sm:$0x3]
    %v782 = vld [vmem:[#allocation3 + $0xa] sm:$0x3]
    %v783 = vld [vmem:[#allocation3 + $0xc] sm:$0x3]
    %v784 = vld [vmem:[#allocation3 + $0xe] sm:$0x3]
    %v785 = vld [vmem:[%s4] sm:$0x1]
    %v787 = vlaneseq
    %v788 = vshrl.u32 %v787, 7
    %v789 = vsub.s32 0, %v788
    %v790 = vrot.slane %v785, %v789
    %v792 = vmul.f32 %v777, %v790
    %v793 = vmul.f32 %v778, %v790
    %v794 = vmul.f32 %v779, %v790
    %v795 = vmul.f32 %v780, %v790
    %v796 = vmul.f32 %v781, %v790
    %v797 = vmul.f32 %v782, %v790
    %v798 = vmul.f32 %v783, %v790
    %v799 = vmul.f32 %v784, %v790
    %v800 = vsel %vm244, %v792, 0.0
    %801 = vadd.xlane.f32.xlu0 %v800
    %v802 = vpop.xlane.xlu0 %801
    %v803 = vsel %vm244, %v793, 0.0
    %804 = vadd.xlane.f32.xlu0 %v803
    %v805 = vpop.xlane.xlu0 %804
    %v806 = vsel %vm244, %v794, 0.0
    %807 = vadd.xlane.f32.xlu0 %v806
    %v808 = vpop.xlane.xlu0 %807
    %v809 = vsel %vm244, %v795, 0.0
    %810 = vadd.xlane.f32.xlu0 %v809
    %v811 = vpop.xlane.xlu0 %810
    %v812 = vsel %vm244, %v796, 0.0
    %813 = vadd.xlane.f32.xlu0 %v812
    %v814 = vpop.xlane.xlu0 %813
    %v815 = vsel %vm244, %v797, 0.0
    %816 = vadd.xlane.f32.xlu0 %v815
    %v817 = vpop.xlane.xlu0 %816
    %v818 = vsel %vm244, %v798, 0.0
    %819 = vadd.xlane.f32.xlu0 %v818
    %v820 = vpop.xlane.xlu0 %819
    %v821 = vsel %vm244, %v799, 0.0
    %822 = vadd.xlane.f32.xlu0 %v821
    %v823 = vpop.xlane.xlu0 %822
    %v824 = vld [vmem:[#allocation4] sm:$0x1]
    %v826 = vlaneseq
    %v827 = vshrl.u32 %v826, 7
    %v828 = vsub.s32 0, %v827
    %v829 = vrot.slane %v824, %v828
    %v831 = vadd.f32 %v802, %v829
    %v832 = vadd.f32 %v805, %v829
    %v833 = vadd.f32 %v808, %v829
    %v834 = vadd.f32 %v811, %v829
    %v835 = vadd.f32 %v814, %v829
    %v836 = vadd.f32 %v817, %v829
    %v837 = vadd.f32 %v820, %v829
    %v838 = vadd.f32 %v823, %v829
    %v839 = vmul.f32 %v831, 1.442695
    %v840 = vpow.pop %v839
    %v841 = vmul.f32 %v832, 1.442695
    %v842 = vpow.pop %v841
    %v843 = vmul.f32 %v833, 1.442695
    %v844 = vpow.pop %v843
    %v845 = vmul.f32 %v834, 1.442695
    %v846 = vpow.pop %v845
    %v847 = vmul.f32 %v835, 1.442695
    %v848 = vpow.pop %v847
    %v849 = vmul.f32 %v836, 1.442695
    %v850 = vpow.pop %v849
    %v851 = vmul.f32 %v837, 1.442695
    %v852 = vpow.pop %v851
    %v853 = vmul.f32 %v838, 1.442695
    %v854 = vpow.pop %v853
    %vm855 = vcmask 1024
    %856 = vst.msk [vmem:[%s8] sm:$0x3] %vm855, %v840
    %857 = vst.msk [vmem:[%s8 + $0x2] sm:$0x3] %vm855, %v842
    %858 = vst.msk [vmem:[%s8 + $0x4] sm:$0x3] %vm855, %v844
    %859 = vst.msk [vmem:[%s8 + $0x6] sm:$0x3] %vm855, %v846
    %860 = vst.msk [vmem:[%s8 + $0x8] sm:$0x3] %vm855, %v848
    %861 = vst.msk [vmem:[%s8 + $0xa] sm:$0x3] %vm855, %v850
    %862 = vst.msk [vmem:[%s8 + $0xc] sm:$0x3] %vm855, %v852
    %863 = vst.msk [vmem:[%s8 + $0xe] sm:$0x3] %vm855, %v854
    // Predicated region
    $region34: #{rnn_forward.1} parent=1 // pred_check
      _
    $region35: #{rnn_forward.1} parent=1 // pred_check_branch
      %865 = sbr.rel (0) target = $region37
    $region36: #{rnn_forward.1} parent=1 // pred_region
      _
    $region37: #{rnn_forward.1} parent=1 // pred_fallthru
      _
    // Predicated region
    $region38: #{rnn_forward.1} parent=1 // pred_check
      _
    $region39: #{rnn_forward.1} parent=1 // pred_check_branch
      %867 = sbr.rel (0) target = $region41
    $region40: #{rnn_forward.1} parent=1 // pred_region
      %s869 = ssub.s32 32, 32
      %870 = vsyncadd [#allocation6], %s869
      %s872 = sshll.u32 [#allocation5], 4
      %s873 = int_to_ptr.vmem [resolvable:$true] %s872
      %875 = dma.vmem_to_hbm [thread:$0]  %s873, 32, %s9, [#allocation6]
    $region41: #{rnn_forward.1} parent=1 // pred_fallthru
      _
    // Predicated region
    $region42: #{rnn_forward.1} parent=1 // pred_check
      _
    $region43: #{rnn_forward.1} parent=1 // pred_check_branch
      %877 = sbr.rel (0) target = $region45
    $region44: #{rnn_forward.1} parent=1 // pred_region
      %s879 = ssub.s32 32, 32
      %880 = vsyncadd [#allocation8], %s879
      %s882 = sshll.u32 [#allocation7], 4
      %s883 = int_to_ptr.vmem [resolvable:$true] %s882
      %885 = dma.vmem_to_hbm [thread:$0]  %s883, 32, %s10, [#allocation8]
    $region45: #{rnn_forward.1} parent=1 // pred_fallthru
      _
    // Predicated region
    $region46: #{rnn_forward.1} parent=1 // pred_check
      _
    $region47: #{rnn_forward.1} parent=1 // pred_check_branch
      %887 = sbr.rel (0) target = $region49
    $region48: #{rnn_forward.1} parent=1 // pred_region
      _
    $region49: #{rnn_forward.1} parent=1 // pred_fallthru
      _
    // Predicated region
    $region50: #{rnn_forward.1} parent=1 // pred_check
      _
    $region51: #{rnn_forward.1} parent=1 // pred_check_branch
      %889 = sbr.rel (0) target = $region53
    $region52: #{rnn_forward.1} parent=1 // pred_region
      %890 = dma.done [#allocation6], 32
    $region53: #{rnn_forward.1} parent=1 // pred_fallthru
      _
    // Predicated region
    $region54: #{rnn_forward.1} parent=1 // pred_check
      _
    $region55: #{rnn_forward.1} parent=1 // pred_check_branch
      %892 = sbr.rel (0) target = $region57
    $region56: #{rnn_forward.1} parent=1 // pred_region
      %893 = dma.done [#allocation8], 32
    $region57: #{rnn_forward.1} parent=1 // pred_fallthru
      _
    %894 = vsyncpa [#allocation6], 1
    %895 = vsyncpa [#allocation8], 1

</llo_original>
